<compile_context>
chip_gen: v5e
topology: v5e:2x2
jax: 0.10.0
libtpu: 0.0.40
codegen_flags: <defaults>
</compile_context>

<pallas_src>
import jax
import jax.numpy as jnp
from jax.experimental import pallas as pl
from jax.experimental.pallas import tpu as pltpu


def product_categorizer_kernel(
    x_ref,      # [T*B, E] f32  embedded tokens (time-major flat)
    mask_ref,   # [T*B, 1] f32
    w_ir_ref, w_iz_ref, w_in_ref,   # [E, H] each
    w_hr_ref, w_hz_ref, w_hn_ref,   # [H, H] each
    b_ir_ref, b_iz_ref, b_in_ref,   # [1, H] each
    b_hr_ref, b_hz_ref, b_hn_ref,   # [1, H] each
    w_fc_ref, b_fc_ref,             # [H, F], [1, F]
    w_fc2_ref, b_fc2_ref,           # [F, C], [1, C]
    out_ref,                        # [B, C] f32 softmax probs
):
    TB, _ = x_ref.shape
    B = out_ref.shape[0]
    T = TB // B
    H = w_hr_ref.shape[0]

    x = x_ref[...]                      # [T*B, E]
    mask = mask_ref[...]                # [T*B, 1]

    # --- Input-side work hoisted out of the recurrence: one batched matmul per gate
    #     over all T*B rows; b_ih is folded in here with a single broadcast.
    gi_r = jnp.dot(x, w_ir_ref[...], preferred_element_type=jnp.float32) + b_ir_ref[...]
    gi_z = jnp.dot(x, w_iz_ref[...], preferred_element_type=jnp.float32) + b_iz_ref[...]
    gi_n = jnp.dot(x, w_in_ref[...], preferred_element_type=jnp.float32) + b_in_ref[...]

    w_hr = w_hr_ref[...]
    w_hz = w_hz_ref[...]
    w_hn = w_hn_ref[...]

    # Hidden-side biases broadcast once (b_hh_n must stay inside the r* term, so it
    # cannot be folded into gi_n).
    bh_r = jnp.broadcast_to(b_hr_ref[...], (B, H))
    bh_z = jnp.broadcast_to(b_hz_ref[...], (B, H))
    bh_n = jnp.broadcast_to(b_hn_ref[...], (B, H))

    h = jnp.zeros((B, H), jnp.float32)
    # T is static and small -> fully unrolled so the LLO scheduler can interleave the
    # serial h @ W_hh matmuls with the gate VPU/EUP work across steps.
    for t in range(T):
        lo = t * B                       # B is a multiple of 8 -> sublane-aligned slices
        gh_r = jnp.dot(h, w_hr, preferred_element_type=jnp.float32) + bh_r
        gh_z = jnp.dot(h, w_hz, preferred_element_type=jnp.float32) + bh_z
        gh_n = jnp.dot(h, w_hn, preferred_element_type=jnp.float32) + bh_n

        r = jax.nn.sigmoid(gi_r[lo:lo + B, :] + gh_r)
        z = jax.nn.sigmoid(gi_z[lo:lo + B, :] + gh_z)
        n = jnp.tanh(gi_n[lo:lo + B, :] + r * gh_n)
        h_new = (1.0 - z) * n + z * h

        m = mask[lo:lo + B, :]           # [B, 1] -> broadcast over H
        h = m * h_new + (1.0 - m) * h    # pack_padded_sequence carry-forward semantics

    # fc -> fc2 -> stable softmax (reciprocal on the EUP slot)
    z1 = jnp.dot(h, w_fc_ref[...], preferred_element_type=jnp.float32) + b_fc_ref[...]
    z2 = jnp.dot(z1, w_fc2_ref[...], preferred_element_type=jnp.float32) + b_fc2_ref[...]

    z2 = z2 - jnp.max(z2, axis=-1, keepdims=True)
    e = jnp.exp(z2)
    inv = pl.reciprocal(jnp.sum(e, axis=-1, keepdims=True), approx=True)
    out_ref[...] = e * inv


def product_categorizer(src_bt, lengths, params):
    """src_bt: [B, T] int32 token ids (0 = pad); lengths: [B] int32. Returns [B, C] probs."""
    B, T = src_bt.shape
    C = params["w_fc2"].shape[1]

    # Pad batch to the 8-sublane height; padded rows get token 0 / length 0 and are
    # dropped after the kernel (each row is independent, so results are unchanged).
    B_pad = max(8, ((B + 7) // 8) * 8)
    pad = B_pad - B
    src_p = jnp.pad(src_bt, ((0, pad), (0, 0)))
    len_p = jnp.pad(lengths, (0, pad))

    # Embedding lookup as a real gather in the wrapper: exact, and the full table is
    # never copied into VMEM (only the touched rows travel to the kernel).
    x = params["emb"][src_p]                                        # [B_pad, T, E]
    x_tm = jnp.transpose(x, (1, 0, 2)).reshape(T * B_pad, -1)       # row = t*B_pad + b

    mask = (jnp.arange(T)[:, None] < len_p[None, :]).astype(jnp.float32)  # [T, B_pad]
    mask = mask.reshape(T * B_pad, 1)

    # Split fused (r|z|n) GRU parameters into lane-aligned per-gate tensors.
    w_ir, w_iz, w_in = jnp.split(params["w_ih"], 3, axis=1)
    w_hr, w_hz, w_hn = jnp.split(params["w_hh"], 3, axis=1)
    b_ir, b_iz, b_in = jnp.split(params["b_ih"], 3, axis=1)
    b_hr, b_hz, b_hn = jnp.split(params["b_hh"], 3, axis=1)

    vmem = pl.BlockSpec(memory_space=pltpu.MemorySpace.VMEM)
    out = pl.pallas_call(
        product_categorizer_kernel,
        out_shape=jax.ShapeDtypeStruct((B_pad, C), jnp.float32),
        in_specs=[vmem] * 18,
        out_specs=vmem,
    )(
        x_tm, mask,
        w_ir, w_iz, w_in,
        w_hr, w_hz, w_hn,
        b_ir, b_iz, b_in,
        b_hr, b_hz, b_hn,
        params["w_fc"], params["b_fc"], params["w_fc2"], params["b_fc2"],
    )
    # TODO(synk): for large batches on v7x, add a ("parallel",) batch grid so both
    # TensorCores get work; unnecessary at B<=8.
    return out[:B]


def reference(src_bt, lengths, params):
    """Pure-JAX reference mirroring the PyTorch forward (packed GRU -> final hidden)."""
    B, T = src_bt.shape
    H = params["w_hh"].shape[0]
    x = params["emb"][src_bt]                               # [B, T, E]
    h = jnp.zeros((B, H), jnp.float32)
    for t in range(T):
        gi = x[:, t, :] @ params["w_ih"] + params["b_ih"]
        gh = h @ params["w_hh"] + params["b_hh"]
        r = jax.nn.sigmoid(gi[:, :H] + gh[:, :H])
        z = jax.nn.sigmoid(gi[:, H:2 * H] + gh[:, H:2 * H])
        n = jnp.tanh(gi[:, 2 * H:] + r * gh[:, 2 * H:])
        h_new = (1.0 - z) * n + z * h
        m = (t < lengths)[:, None].astype(jnp.float32)
        h = m * h_new + (1.0 - m) * h
    z1 = h @ params["w_fc"] + params["b_fc"]
    z2 = z1 @ params["w_fc2"] + params["b_fc2"]
    return jax.nn.softmax(z2, axis=1)


def init_params(key, vocab_size, n_categories, embedding_size=64, hidden=64, fc_dim=32):
    ks = jax.random.split(key, 10)
    s = 0.1
    emb = s * jax.random.normal(ks[0], (vocab_size, embedding_size), jnp.float32)
    emb = emb.at[0].set(0.0)  # padding_idx=0
    return {
        "emb": emb,
        # PyTorch GRU weight_ih_l0 is [3H, E]; stored transposed here, gate order (r|z|n).
        "w_ih": s * jax.random.normal(ks[1], (embedding_size, 3 * hidden), jnp.float32),
        "w_hh": s * jax.random.normal(ks[2], (hidden, 3 * hidden), jnp.float32),
        "b_ih": s * jax.random.normal(ks[3], (1, 3 * hidden), jnp.float32),
        "b_hh": s * jax.random.normal(ks[4], (1, 3 * hidden), jnp.float32),
        "w_fc": s * jax.random.normal(ks[5], (hidden, fc_dim), jnp.float32),
        "b_fc": s * jax.random.normal(ks[6], (1, fc_dim), jnp.float32),
        "w_fc2": s * jax.random.normal(ks[7], (fc_dim, n_categories), jnp.float32),
        "b_fc2": s * jax.random.normal(ks[8], (1, n_categories), jnp.float32),
    }


if __name__ == "__main__":
    key = jax.random.PRNGKey(0)
    B, T = 2, 8
    vocab_size, n_categories = 50, 16

    params = init_params(key, vocab_size, n_categories)

    k_src, k_len = jax.random.split(jax.random.fold_in(key, 1))
    lengths = jnp.array([8, 5], dtype=jnp.int32)
    src = jax.random.randint(k_src, (B, T), 1, vocab_size, dtype=jnp.int32)
    # zero out padded positions (padding_idx=0), consistent with pack_padded_sequence usage
    src = jnp.where(jnp.arange(T)[None, :] < lengths[:, None], src, 0)

    out = product_categorizer(src, lengths, params)
    out = jax.block_until_ready(out)

    ref = reference(src, lengths, params)
    assert out.shape == (B, n_categories)
    assert jnp.allclose(jnp.sum(out, axis=1), 1.0, atol=2e-3)
    assert jnp.allclose(out, ref, atol=5e-3), (out, ref)

    print("KERNEL_OK")
</pallas_src>

<mosaic_0001>
module attributes {stable_mosaic.version = 11 : i64} {
  func.func @product_categorizer_kernel(%arg0: memref<64x64xf32, #tpu.memory_space<vmem>>, %arg1: memref<64x1xf32, #tpu.memory_space<vmem>>, %arg2: memref<64x64xf32, #tpu.memory_space<vmem>>, %arg3: memref<64x64xf32, #tpu.memory_space<vmem>>, %arg4: memref<64x64xf32, #tpu.memory_space<vmem>>, %arg5: memref<64x64xf32, #tpu.memory_space<vmem>>, %arg6: memref<64x64xf32, #tpu.memory_space<vmem>>, %arg7: memref<64x64xf32, #tpu.memory_space<vmem>>, %arg8: memref<1x64xf32, #tpu.memory_space<vmem>>, %arg9: memref<1x64xf32, #tpu.memory_space<vmem>>, %arg10: memref<1x64xf32, #tpu.memory_space<vmem>>, %arg11: memref<1x64xf32, #tpu.memory_space<vmem>>, %arg12: memref<1x64xf32, #tpu.memory_space<vmem>>, %arg13: memref<1x64xf32, #tpu.memory_space<vmem>>, %arg14: memref<64x32xf32, #tpu.memory_space<vmem>>, %arg15: memref<1x32xf32, #tpu.memory_space<vmem>>, %arg16: memref<32x16xf32, #tpu.memory_space<vmem>>, %arg17: memref<1x16xf32, #tpu.memory_space<vmem>>, %arg18: memref<8x16xf32, #tpu.memory_space<vmem>>) attributes {dimension_semantics = [], scalar_prefetch = 0 : i64, scratch_operands = 0 : i64, tpu.core_type = #tpu.core_type<tc>} {
    %c0 = arith.constant 0 : index
    %c0_0 = arith.constant 0 : index
    %0 = vector.load %arg0[%c0, %c0_0] : memref<64x64xf32, #tpu.memory_space<vmem>>, vector<64x64xf32>
    %c0_1 = arith.constant 0 : index
    %c0_2 = arith.constant 0 : index
    %1 = vector.load %arg1[%c0_1, %c0_2] : memref<64x1xf32, #tpu.memory_space<vmem>>, vector<64x1xf32>
    %c0_3 = arith.constant 0 : index
    %c0_4 = arith.constant 0 : index
    %2 = vector.load %arg2[%c0_3, %c0_4] : memref<64x64xf32, #tpu.memory_space<vmem>>, vector<64x64xf32>
    %cst = arith.constant dense<0.000000e+00> : vector<64x64xf32>
    %3 = tpu.matmul %0, %2, %cst {dimension_numbers = #tpu.dot_dimension_numbers<[1], [0], [0], [1], [0, 0, 1, 1], [], []>} : vector<64x64xf32>, vector<64x64xf32>, vector<64x64xf32> -> vector<64x64xf32>
    %c0_5 = arith.constant 0 : index
    %c0_6 = arith.constant 0 : index
    %4 = vector.load %arg8[%c0_5, %c0_6] : memref<1x64xf32, #tpu.memory_space<vmem>>, vector<1x64xf32>
    %5 = vector.broadcast %4 : vector<1x64xf32> to vector<64x64xf32>
    %6 = arith.addf %3, %5 : vector<64x64xf32>
    %c0_7 = arith.constant 0 : index
    %c0_8 = arith.constant 0 : index
    %7 = vector.load %arg3[%c0_7, %c0_8] : memref<64x64xf32, #tpu.memory_space<vmem>>, vector<64x64xf32>
    %cst_9 = arith.constant dense<0.000000e+00> : vector<64x64xf32>
    %8 = tpu.matmul %0, %7, %cst_9 {dimension_numbers = #tpu.dot_dimension_numbers<[1], [0], [0], [1], [0, 0, 1, 1], [], []>} : vector<64x64xf32>, vector<64x64xf32>, vector<64x64xf32> -> vector<64x64xf32>
    %c0_10 = arith.constant 0 : index
    %c0_11 = arith.constant 0 : index
    %9 = vector.load %arg9[%c0_10, %c0_11] : memref<1x64xf32, #tpu.memory_space<vmem>>, vector<1x64xf32>
    %10 = vector.broadcast %9 : vector<1x64xf32> to vector<64x64xf32>
    %11 = arith.addf %8, %10 : vector<64x64xf32>
    %c0_12 = arith.constant 0 : index
    %c0_13 = arith.constant 0 : index
    %12 = vector.load %arg4[%c0_12, %c0_13] : memref<64x64xf32, #tpu.memory_space<vmem>>, vector<64x64xf32>
    %cst_14 = arith.constant dense<0.000000e+00> : vector<64x64xf32>
    %13 = tpu.matmul %0, %12, %cst_14 {dimension_numbers = #tpu.dot_dimension_numbers<[1], [0], [0], [1], [0, 0, 1, 1], [], []>} : vector<64x64xf32>, vector<64x64xf32>, vector<64x64xf32> -> vector<64x64xf32>
    %c0_15 = arith.constant 0 : index
    %c0_16 = arith.constant 0 : index
    %14 = vector.load %arg10[%c0_15, %c0_16] : memref<1x64xf32, #tpu.memory_space<vmem>>, vector<1x64xf32>
    %15 = vector.broadcast %14 : vector<1x64xf32> to vector<64x64xf32>
    %16 = arith.addf %13, %15 : vector<64x64xf32>
    %c0_17 = arith.constant 0 : index
    %c0_18 = arith.constant 0 : index
    %17 = vector.load %arg5[%c0_17, %c0_18] : memref<64x64xf32, #tpu.memory_space<vmem>>, vector<64x64xf32>
    %c0_19 = arith.constant 0 : index
    %c0_20 = arith.constant 0 : index
    %18 = vector.load %arg6[%c0_19, %c0_20] : memref<64x64xf32, #tpu.memory_space<vmem>>, vector<64x64xf32>
    %c0_21 = arith.constant 0 : index
    %c0_22 = arith.constant 0 : index
    %19 = vector.load %arg7[%c0_21, %c0_22] : memref<64x64xf32, #tpu.memory_space<vmem>>, vector<64x64xf32>
    %c0_23 = arith.constant 0 : index
    %c0_24 = arith.constant 0 : index
    %20 = vector.load %arg11[%c0_23, %c0_24] : memref<1x64xf32, #tpu.memory_space<vmem>>, vector<1x64xf32>
    %21 = vector.shape_cast %20 : vector<1x64xf32> to vector<1x64xf32>
    %22 = vector.broadcast %21 : vector<1x64xf32> to vector<8x64xf32>
    %c0_25 = arith.constant 0 : index
    %c0_26 = arith.constant 0 : index
    %23 = vector.load %arg12[%c0_25, %c0_26] : memref<1x64xf32, #tpu.memory_space<vmem>>, vector<1x64xf32>
    %24 = vector.shape_cast %23 : vector<1x64xf32> to vector<1x64xf32>
    %25 = vector.broadcast %24 : vector<1x64xf32> to vector<8x64xf32>
    %c0_27 = arith.constant 0 : index
    %c0_28 = arith.constant 0 : index
    %26 = vector.load %arg13[%c0_27, %c0_28] : memref<1x64xf32, #tpu.memory_space<vmem>>, vector<1x64xf32>
    %27 = vector.shape_cast %26 : vector<1x64xf32> to vector<1x64xf32>
    %28 = vector.broadcast %27 : vector<1x64xf32> to vector<8x64xf32>
    %cst_29 = arith.constant 0.000000e+00 : f32
    %29 = vector.broadcast %cst_29 : f32 to vector<8x64xf32>
    %cst_30 = arith.constant dense<0.000000e+00> : vector<8x64xf32>
    %30 = tpu.matmul %29, %17, %cst_30 {dimension_numbers = #tpu.dot_dimension_numbers<[1], [0], [0], [1], [0, 0, 1, 1], [], []>} : vector<8x64xf32>, vector<64x64xf32>, vector<8x64xf32> -> vector<8x64xf32>
    %31 = arith.addf %30, %22 : vector<8x64xf32>
    %cst_31 = arith.constant dense<0.000000e+00> : vector<8x64xf32>
    %32 = tpu.matmul %29, %18, %cst_31 {dimension_numbers = #tpu.dot_dimension_numbers<[1], [0], [0], [1], [0, 0, 1, 1], [], []>} : vector<8x64xf32>, vector<64x64xf32>, vector<8x64xf32> -> vector<8x64xf32>
    %33 = arith.addf %32, %25 : vector<8x64xf32>
    %cst_32 = arith.constant dense<0.000000e+00> : vector<8x64xf32>
    %34 = tpu.matmul %29, %19, %cst_32 {dimension_numbers = #tpu.dot_dimension_numbers<[1], [0], [0], [1], [0, 0, 1, 1], [], []>} : vector<8x64xf32>, vector<64x64xf32>, vector<8x64xf32> -> vector<8x64xf32>
    %35 = arith.addf %34, %28 : vector<8x64xf32>
    %36 = vector.extract_strided_slice %6 {offsets = [0, 0], sizes = [8, 64], strides = [1, 1]} : vector<64x64xf32> to vector<8x64xf32>
    %37 = arith.addf %36, %31 : vector<8x64xf32>
    %38 = arith.negf %37 : vector<8x64xf32>
    %39 = math.exp %38 : vector<8x64xf32>
    %cst_33 = arith.constant 1.000000e+00 : f32
    %40 = vector.broadcast %cst_33 : f32 to vector<8x64xf32>
    %41 = arith.addf %40, %39 : vector<8x64xf32>
    %42 = arith.divf %40, %41 : vector<8x64xf32>
    %43 = vector.extract_strided_slice %11 {offsets = [0, 0], sizes = [8, 64], strides = [1, 1]} : vector<64x64xf32> to vector<8x64xf32>
    %44 = arith.addf %43, %33 : vector<8x64xf32>
    %45 = arith.negf %44 : vector<8x64xf32>
    %46 = math.exp %45 : vector<8x64xf32>
    %cst_34 = arith.constant 1.000000e+00 : f32
    %47 = vector.broadcast %cst_34 : f32 to vector<8x64xf32>
    %48 = arith.addf %47, %46 : vector<8x64xf32>
    %49 = arith.divf %47, %48 : vector<8x64xf32>
    %50 = vector.extract_strided_slice %16 {offsets = [0, 0], sizes = [8, 64], strides = [1, 1]} : vector<64x64xf32> to vector<8x64xf32>
    %51 = arith.mulf %42, %35 : vector<8x64xf32>
    %52 = arith.addf %50, %51 : vector<8x64xf32>
    %53 = math.tanh %52 : vector<8x64xf32>
    %cst_35 = arith.constant 1.000000e+00 : f32
    %54 = vector.broadcast %cst_35 : f32 to vector<8x64xf32>
    %55 = arith.subf %54, %49 : vector<8x64xf32>
    %56 = arith.mulf %55, %53 : vector<8x64xf32>
    %57 = arith.mulf %49, %29 : vector<8x64xf32>
    %58 = arith.addf %56, %57 : vector<8x64xf32>
    %59 = vector.extract_strided_slice %1 {offsets = [0, 0], sizes = [8, 1], strides = [1, 1]} : vector<64x1xf32> to vector<8x1xf32>
    %60 = vector.broadcast %59 : vector<8x1xf32> to vector<8x64xf32>
    %61 = arith.mulf %60, %58 : vector<8x64xf32>
    %cst_36 = arith.constant 1.000000e+00 : f32
    %62 = vector.broadcast %cst_36 : f32 to vector<8x1xf32>
    %63 = arith.subf %62, %59 : vector<8x1xf32>
    %64 = vector.broadcast %63 : vector<8x1xf32> to vector<8x64xf32>
    %65 = arith.mulf %64, %29 : vector<8x64xf32>
    %66 = arith.addf %61, %65 : vector<8x64xf32>
    %cst_37 = arith.constant dense<0.000000e+00> : vector<8x64xf32>
    %67 = tpu.matmul %66, %17, %cst_37 {dimension_numbers = #tpu.dot_dimension_numbers<[1], [0], [0], [1], [0, 0, 1, 1], [], []>} : vector<8x64xf32>, vector<64x64xf32>, vector<8x64xf32> -> vector<8x64xf32>
    %68 = arith.addf %67, %22 : vector<8x64xf32>
    %cst_38 = arith.constant dense<0.000000e+00> : vector<8x64xf32>
    %69 = tpu.matmul %66, %18, %cst_38 {dimension_numbers = #tpu.dot_dimension_numbers<[1], [0], [0], [1], [0, 0, 1, 1], [], []>} : vector<8x64xf32>, vector<64x64xf32>, vector<8x64xf32> -> vector<8x64xf32>
    %70 = arith.addf %69, %25 : vector<8x64xf32>
    %cst_39 = arith.constant dense<0.000000e+00> : vector<8x64xf32>
    %71 = tpu.matmul %66, %19, %cst_39 {dimension_numbers = #tpu.dot_dimension_numbers<[1], [0], [0], [1], [0, 0, 1, 1], [], []>} : vector<8x64xf32>, vector<64x64xf32>, vector<8x64xf32> -> vector<8x64xf32>
    %72 = arith.addf %71, %28 : vector<8x64xf32>
    %73 = vector.extract_strided_slice %6 {offsets = [8, 0], sizes = [8, 64], strides = [1, 1]} : vector<64x64xf32> to vector<8x64xf32>
    %74 = arith.addf %73, %68 : vector<8x64xf32>
    %75 = arith.negf %74 : vector<8x64xf32>
    %76 = math.exp %75 : vector<8x64xf32>
    %cst_40 = arith.constant 1.000000e+00 : f32
    %77 = vector.broadcast %cst_40 : f32 to vector<8x64xf32>
    %78 = arith.addf %77, %76 : vector<8x64xf32>
    %79 = arith.divf %77, %78 : vector<8x64xf32>
    %80 = vector.extract_strided_slice %11 {offsets = [8, 0], sizes = [8, 64], strides = [1, 1]} : vector<64x64xf32> to vector<8x64xf32>
    %81 = arith.addf %80, %70 : vector<8x64xf32>
    %82 = arith.negf %81 : vector<8x64xf32>
    %83 = math.exp %82 : vector<8x64xf32>
    %cst_41 = arith.constant 1.000000e+00 : f32
    %84 = vector.broadcast %cst_41 : f32 to vector<8x64xf32>
    %85 = arith.addf %84, %83 : vector<8x64xf32>
    %86 = arith.divf %84, %85 : vector<8x64xf32>
    %87 = vector.extract_strided_slice %16 {offsets = [8, 0], sizes = [8, 64], strides = [1, 1]} : vector<64x64xf32> to vector<8x64xf32>
    %88 = arith.mulf %79, %72 : vector<8x64xf32>
    %89 = arith.addf %87, %88 : vector<8x64xf32>
    %90 = math.tanh %89 : vector<8x64xf32>
    %cst_42 = arith.constant 1.000000e+00 : f32
    %91 = vector.broadcast %cst_42 : f32 to vector<8x64xf32>
    %92 = arith.subf %91, %86 : vector<8x64xf32>
    %93 = arith.mulf %92, %90 : vector<8x64xf32>
    %94 = arith.mulf %86, %66 : vector<8x64xf32>
    %95 = arith.addf %93, %94 : vector<8x64xf32>
    %96 = vector.extract_strided_slice %1 {offsets = [8, 0], sizes = [8, 1], strides = [1, 1]} : vector<64x1xf32> to vector<8x1xf32>
    %97 = vector.broadcast %96 : vector<8x1xf32> to vector<8x64xf32>
    %98 = arith.mulf %97, %95 : vector<8x64xf32>
    %cst_43 = arith.constant 1.000000e+00 : f32
    %99 = vector.broadcast %cst_43 : f32 to vector<8x1xf32>
    %100 = arith.subf %99, %96 : vector<8x1xf32>
    %101 = vector.broadcast %100 : vector<8x1xf32> to vector<8x64xf32>
    %102 = arith.mulf %101, %66 : vector<8x64xf32>
    %103 = arith.addf %98, %102 : vector<8x64xf32>
    %cst_44 = arith.constant dense<0.000000e+00> : vector<8x64xf32>
    %104 = tpu.matmul %103, %17, %cst_44 {dimension_numbers = #tpu.dot_dimension_numbers<[1], [0], [0], [1], [0, 0, 1, 1], [], []>} : vector<8x64xf32>, vector<64x64xf32>, vector<8x64xf32> -> vector<8x64xf32>
    %105 = arith.addf %104, %22 : vector<8x64xf32>
    %cst_45 = arith.constant dense<0.000000e+00> : vector<8x64xf32>
    %106 = tpu.matmul %103, %18, %cst_45 {dimension_numbers = #tpu.dot_dimension_numbers<[1], [0], [0], [1], [0, 0, 1, 1], [], []>} : vector<8x64xf32>, vector<64x64xf32>, vector<8x64xf32> -> vector<8x64xf32>
    %107 = arith.addf %106, %25 : vector<8x64xf32>
    %cst_46 = arith.constant dense<0.000000e+00> : vector<8x64xf32>
    %108 = tpu.matmul %103, %19, %cst_46 {dimension_numbers = #tpu.dot_dimension_numbers<[1], [0], [0], [1], [0, 0, 1, 1], [], []>} : vector<8x64xf32>, vector<64x64xf32>, vector<8x64xf32> -> vector<8x64xf32>
    %109 = arith.addf %108, %28 : vector<8x64xf32>
    %110 = vector.extract_strided_slice %6 {offsets = [16, 0], sizes = [8, 64], strides = [1, 1]} : vector<64x64xf32> to vector<8x64xf32>
    %111 = arith.addf %110, %105 : vector<8x64xf32>
    %112 = arith.negf %111 : vector<8x64xf32>
    %113 = math.exp %112 : vector<8x64xf32>
    %cst_47 = arith.constant 1.000000e+00 : f32
    %114 = vector.broadcast %cst_47 : f32 to vector<8x64xf32>
    %115 = arith.addf %114, %113 : vector<8x64xf32>
    %116 = arith.divf %114, %115 : vector<8x64xf32>
    %117 = vector.extract_strided_slice %11 {offsets = [16, 0], sizes = [8, 64], strides = [1, 1]} : vector<64x64xf32> to vector<8x64xf32>
    %118 = arith.addf %117, %107 : vector<8x64xf32>
    %119 = arith.negf %118 : vector<8x64xf32>
    %120 = math.exp %119 : vector<8x64xf32>
    %cst_48 = arith.constant 1.000000e+00 : f32
    %121 = vector.broadcast %cst_48 : f32 to vector<8x64xf32>
    %122 = arith.addf %121, %120 : vector<8x64xf32>
    %123 = arith.divf %121, %122 : vector<8x64xf32>
    %124 = vector.extract_strided_slice %16 {offsets = [16, 0], sizes = [8, 64], strides = [1, 1]} : vector<64x64xf32> to vector<8x64xf32>
    %125 = arith.mulf %116, %109 : vector<8x64xf32>
    %126 = arith.addf %124, %125 : vector<8x64xf32>
    %127 = math.tanh %126 : vector<8x64xf32>
    %cst_49 = arith.constant 1.000000e+00 : f32
    %128 = vector.broadcast %cst_49 : f32 to vector<8x64xf32>
    %129 = arith.subf %128, %123 : vector<8x64xf32>
    %130 = arith.mulf %129, %127 : vector<8x64xf32>
    %131 = arith.mulf %123, %103 : vector<8x64xf32>
    %132 = arith.addf %130, %131 : vector<8x64xf32>
    %133 = vector.extract_strided_slice %1 {offsets = [16, 0], sizes = [8, 1], strides = [1, 1]} : vector<64x1xf32> to vector<8x1xf32>
    %134 = vector.broadcast %133 : vector<8x1xf32> to vector<8x64xf32>
    %135 = arith.mulf %134, %132 : vector<8x64xf32>
    %cst_50 = arith.constant 1.000000e+00 : f32
    %136 = vector.broadcast %cst_50 : f32 to vector<8x1xf32>
    %137 = arith.subf %136, %133 : vector<8x1xf32>
    %138 = vector.broadcast %137 : vector<8x1xf32> to vector<8x64xf32>
    %139 = arith.mulf %138, %103 : vector<8x64xf32>
    %140 = arith.addf %135, %139 : vector<8x64xf32>
    %cst_51 = arith.constant dense<0.000000e+00> : vector<8x64xf32>
    %141 = tpu.matmul %140, %17, %cst_51 {dimension_numbers = #tpu.dot_dimension_numbers<[1], [0], [0], [1], [0, 0, 1, 1], [], []>} : vector<8x64xf32>, vector<64x64xf32>, vector<8x64xf32> -> vector<8x64xf32>
    %142 = arith.addf %141, %22 : vector<8x64xf32>
    %cst_52 = arith.constant dense<0.000000e+00> : vector<8x64xf32>
    %143 = tpu.matmul %140, %18, %cst_52 {dimension_numbers = #tpu.dot_dimension_numbers<[1], [0], [0], [1], [0, 0, 1, 1], [], []>} : vector<8x64xf32>, vector<64x64xf32>, vector<8x64xf32> -> vector<8x64xf32>
    %144 = arith.addf %143, %25 : vector<8x64xf32>
    %cst_53 = arith.constant dense<0.000000e+00> : vector<8x64xf32>
    %145 = tpu.matmul %140, %19, %cst_53 {dimension_numbers = #tpu.dot_dimension_numbers<[1], [0], [0], [1], [0, 0, 1, 1], [], []>} : vector<8x64xf32>, vector<64x64xf32>, vector<8x64xf32> -> vector<8x64xf32>
    %146 = arith.addf %145, %28 : vector<8x64xf32>
    %147 = vector.extract_strided_slice %6 {offsets = [24, 0], sizes = [8, 64], strides = [1, 1]} : vector<64x64xf32> to vector<8x64xf32>
    %148 = arith.addf %147, %142 : vector<8x64xf32>
    %149 = arith.negf %148 : vector<8x64xf32>
    %150 = math.exp %149 : vector<8x64xf32>
    %cst_54 = arith.constant 1.000000e+00 : f32
    %151 = vector.broadcast %cst_54 : f32 to vector<8x64xf32>
    %152 = arith.addf %151, %150 : vector<8x64xf32>
    %153 = arith.divf %151, %152 : vector<8x64xf32>
    %154 = vector.extract_strided_slice %11 {offsets = [24, 0], sizes = [8, 64], strides = [1, 1]} : vector<64x64xf32> to vector<8x64xf32>
    %155 = arith.addf %154, %144 : vector<8x64xf32>
    %156 = arith.negf %155 : vector<8x64xf32>
    %157 = math.exp %156 : vector<8x64xf32>
    %cst_55 = arith.constant 1.000000e+00 : f32
    %158 = vector.broadcast %cst_55 : f32 to vector<8x64xf32>
    %159 = arith.addf %158, %157 : vector<8x64xf32>
    %160 = arith.divf %158, %159 : vector<8x64xf32>
    %161 = vector.extract_strided_slice %16 {offsets = [24, 0], sizes = [8, 64], strides = [1, 1]} : vector<64x64xf32> to vector<8x64xf32>
    %162 = arith.mulf %153, %146 : vector<8x64xf32>
    %163 = arith.addf %161, %162 : vector<8x64xf32>
    %164 = math.tanh %163 : vector<8x64xf32>
    %cst_56 = arith.constant 1.000000e+00 : f32
    %165 = vector.broadcast %cst_56 : f32 to vector<8x64xf32>
    %166 = arith.subf %165, %160 : vector<8x64xf32>
    %167 = arith.mulf %166, %164 : vector<8x64xf32>
    %168 = arith.mulf %160, %140 : vector<8x64xf32>
    %169 = arith.addf %167, %168 : vector<8x64xf32>
    %170 = vector.extract_strided_slice %1 {offsets = [24, 0], sizes = [8, 1], strides = [1, 1]} : vector<64x1xf32> to vector<8x1xf32>
    %171 = vector.broadcast %170 : vector<8x1xf32> to vector<8x64xf32>
    %172 = arith.mulf %171, %169 : vector<8x64xf32>
    %cst_57 = arith.constant 1.000000e+00 : f32
    %173 = vector.broadcast %cst_57 : f32 to vector<8x1xf32>
    %174 = arith.subf %173, %170 : vector<8x1xf32>
    %175 = vector.broadcast %174 : vector<8x1xf32> to vector<8x64xf32>
    %176 = arith.mulf %175, %140 : vector<8x64xf32>
    %177 = arith.addf %172, %176 : vector<8x64xf32>
    %cst_58 = arith.constant dense<0.000000e+00> : vector<8x64xf32>
    %178 = tpu.matmul %177, %17, %cst_58 {dimension_numbers = #tpu.dot_dimension_numbers<[1], [0], [0], [1], [0, 0, 1, 1], [], []>} : vector<8x64xf32>, vector<64x64xf32>, vector<8x64xf32> -> vector<8x64xf32>
    %179 = arith.addf %178, %22 : vector<8x64xf32>
    %cst_59 = arith.constant dense<0.000000e+00> : vector<8x64xf32>
    %180 = tpu.matmul %177, %18, %cst_59 {dimension_numbers = #tpu.dot_dimension_numbers<[1], [0], [0], [1], [0, 0, 1, 1], [], []>} : vector<8x64xf32>, vector<64x64xf32>, vector<8x64xf32> -> vector<8x64xf32>
    %181 = arith.addf %180, %25 : vector<8x64xf32>
    %cst_60 = arith.constant dense<0.000000e+00> : vector<8x64xf32>
    %182 = tpu.matmul %177, %19, %cst_60 {dimension_numbers = #tpu.dot_dimension_numbers<[1], [0], [0], [1], [0, 0, 1, 1], [], []>} : vector<8x64xf32>, vector<64x64xf32>, vector<8x64xf32> -> vector<8x64xf32>
    %183 = arith.addf %182, %28 : vector<8x64xf32>
    %184 = vector.extract_strided_slice %6 {offsets = [32, 0], sizes = [8, 64], strides = [1, 1]} : vector<64x64xf32> to vector<8x64xf32>
    %185 = arith.addf %184, %179 : vector<8x64xf32>
    %186 = arith.negf %185 : vector<8x64xf32>
    %187 = math.exp %186 : vector<8x64xf32>
    %cst_61 = arith.constant 1.000000e+00 : f32
    %188 = vector.broadcast %cst_61 : f32 to vector<8x64xf32>
    %189 = arith.addf %188, %187 : vector<8x64xf32>
    %190 = arith.divf %188, %189 : vector<8x64xf32>
    %191 = vector.extract_strided_slice %11 {offsets = [32, 0], sizes = [8, 64], strides = [1, 1]} : vector<64x64xf32> to vector<8x64xf32>
    %192 = arith.addf %191, %181 : vector<8x64xf32>
    %193 = arith.negf %192 : vector<8x64xf32>
    %194 = math.exp %193 : vector<8x64xf32>
    %cst_62 = arith.constant 1.000000e+00 : f32
    %195 = vector.broadcast %cst_62 : f32 to vector<8x64xf32>
    %196 = arith.addf %195, %194 : vector<8x64xf32>
    %197 = arith.divf %195, %196 : vector<8x64xf32>
    %198 = vector.extract_strided_slice %16 {offsets = [32, 0], sizes = [8, 64], strides = [1, 1]} : vector<64x64xf32> to vector<8x64xf32>
    %199 = arith.mulf %190, %183 : vector<8x64xf32>
    %200 = arith.addf %198, %199 : vector<8x64xf32>
    %201 = math.tanh %200 : vector<8x64xf32>
    %cst_63 = arith.constant 1.000000e+00 : f32
    %202 = vector.broadcast %cst_63 : f32 to vector<8x64xf32>
    %203 = arith.subf %202, %197 : vector<8x64xf32>
    %204 = arith.mulf %203, %201 : vector<8x64xf32>
    %205 = arith.mulf %197, %177 : vector<8x64xf32>
    %206 = arith.addf %204, %205 : vector<8x64xf32>
    %207 = vector.extract_strided_slice %1 {offsets = [32, 0], sizes = [8, 1], strides = [1, 1]} : vector<64x1xf32> to vector<8x1xf32>
    %208 = vector.broadcast %207 : vector<8x1xf32> to vector<8x64xf32>
    %209 = arith.mulf %208, %206 : vector<8x64xf32>
    %cst_64 = arith.constant 1.000000e+00 : f32
    %210 = vector.broadcast %cst_64 : f32 to vector<8x1xf32>
    %211 = arith.subf %210, %207 : vector<8x1xf32>
    %212 = vector.broadcast %211 : vector<8x1xf32> to vector<8x64xf32>
    %213 = arith.mulf %212, %177 : vector<8x64xf32>
    %214 = arith.addf %209, %213 : vector<8x64xf32>
    %cst_65 = arith.constant dense<0.000000e+00> : vector<8x64xf32>
    %215 = tpu.matmul %214, %17, %cst_65 {dimension_numbers = #tpu.dot_dimension_numbers<[1], [0], [0], [1], [0, 0, 1, 1], [], []>} : vector<8x64xf32>, vector<64x64xf32>, vector<8x64xf32> -> vector<8x64xf32>
    %216 = arith.addf %215, %22 : vector<8x64xf32>
    %cst_66 = arith.constant dense<0.000000e+00> : vector<8x64xf32>
    %217 = tpu.matmul %214, %18, %cst_66 {dimension_numbers = #tpu.dot_dimension_numbers<[1], [0], [0], [1], [0, 0, 1, 1], [], []>} : vector<8x64xf32>, vector<64x64xf32>, vector<8x64xf32> -> vector<8x64xf32>
    %218 = arith.addf %217, %25 : vector<8x64xf32>
    %cst_67 = arith.constant dense<0.000000e+00> : vector<8x64xf32>
    %219 = tpu.matmul %214, %19, %cst_67 {dimension_numbers = #tpu.dot_dimension_numbers<[1], [0], [0], [1], [0, 0, 1, 1], [], []>} : vector<8x64xf32>, vector<64x64xf32>, vector<8x64xf32> -> vector<8x64xf32>
    %220 = arith.addf %219, %28 : vector<8x64xf32>
    %221 = vector.extract_strided_slice %6 {offsets = [40, 0], sizes = [8, 64], strides = [1, 1]} : vector<64x64xf32> to vector<8x64xf32>
    %222 = arith.addf %221, %216 : vector<8x64xf32>
    %223 = arith.negf %222 : vector<8x64xf32>
    %224 = math.exp %223 : vector<8x64xf32>
    %cst_68 = arith.constant 1.000000e+00 : f32
    %225 = vector.broadcast %cst_68 : f32 to vector<8x64xf32>
    %226 = arith.addf %225, %224 : vector<8x64xf32>
    %227 = arith.divf %225, %226 : vector<8x64xf32>
    %228 = vector.extract_strided_slice %11 {offsets = [40, 0], sizes = [8, 64], strides = [1, 1]} : vector<64x64xf32> to vector<8x64xf32>
    %229 = arith.addf %228, %218 : vector<8x64xf32>
    %230 = arith.negf %229 : vector<8x64xf32>
    %231 = math.exp %230 : vector<8x64xf32>
    %cst_69 = arith.constant 1.000000e+00 : f32
    %232 = vector.broadcast %cst_69 : f32 to vector<8x64xf32>
    %233 = arith.addf %232, %231 : vector<8x64xf32>
    %234 = arith.divf %232, %233 : vector<8x64xf32>
    %235 = vector.extract_strided_slice %16 {offsets = [40, 0], sizes = [8, 64], strides = [1, 1]} : vector<64x64xf32> to vector<8x64xf32>
    %236 = arith.mulf %227, %220 : vector<8x64xf32>
    %237 = arith.addf %235, %236 : vector<8x64xf32>
    %238 = math.tanh %237 : vector<8x64xf32>
    %cst_70 = arith.constant 1.000000e+00 : f32
    %239 = vector.broadcast %cst_70 : f32 to vector<8x64xf32>
    %240 = arith.subf %239, %234 : vector<8x64xf32>
    %241 = arith.mulf %240, %238 : vector<8x64xf32>
    %242 = arith.mulf %234, %214 : vector<8x64xf32>
    %243 = arith.addf %241, %242 : vector<8x64xf32>
    %244 = vector.extract_strided_slice %1 {offsets = [40, 0], sizes = [8, 1], strides = [1, 1]} : vector<64x1xf32> to vector<8x1xf32>
    %245 = vector.broadcast %244 : vector<8x1xf32> to vector<8x64xf32>
    %246 = arith.mulf %245, %243 : vector<8x64xf32>
    %cst_71 = arith.constant 1.000000e+00 : f32
    %247 = vector.broadcast %cst_71 : f32 to vector<8x1xf32>
    %248 = arith.subf %247, %244 : vector<8x1xf32>
    %249 = vector.broadcast %248 : vector<8x1xf32> to vector<8x64xf32>
    %250 = arith.mulf %249, %214 : vector<8x64xf32>
    %251 = arith.addf %246, %250 : vector<8x64xf32>
    %cst_72 = arith.constant dense<0.000000e+00> : vector<8x64xf32>
    %252 = tpu.matmul %251, %17, %cst_72 {dimension_numbers = #tpu.dot_dimension_numbers<[1], [0], [0], [1], [0, 0, 1, 1], [], []>} : vector<8x64xf32>, vector<64x64xf32>, vector<8x64xf32> -> vector<8x64xf32>
    %253 = arith.addf %252, %22 : vector<8x64xf32>
    %cst_73 = arith.constant dense<0.000000e+00> : vector<8x64xf32>
    %254 = tpu.matmul %251, %18, %cst_73 {dimension_numbers = #tpu.dot_dimension_numbers<[1], [0], [0], [1], [0, 0, 1, 1], [], []>} : vector<8x64xf32>, vector<64x64xf32>, vector<8x64xf32> -> vector<8x64xf32>
    %255 = arith.addf %254, %25 : vector<8x64xf32>
    %cst_74 = arith.constant dense<0.000000e+00> : vector<8x64xf32>
    %256 = tpu.matmul %251, %19, %cst_74 {dimension_numbers = #tpu.dot_dimension_numbers<[1], [0], [0], [1], [0, 0, 1, 1], [], []>} : vector<8x64xf32>, vector<64x64xf32>, vector<8x64xf32> -> vector<8x64xf32>
    %257 = arith.addf %256, %28 : vector<8x64xf32>
    %258 = vector.extract_strided_slice %6 {offsets = [48, 0], sizes = [8, 64], strides = [1, 1]} : vector<64x64xf32> to vector<8x64xf32>
    %259 = arith.addf %258, %253 : vector<8x64xf32>
    %260 = arith.negf %259 : vector<8x64xf32>
    %261 = math.exp %260 : vector<8x64xf32>
    %cst_75 = arith.constant 1.000000e+00 : f32
    %262 = vector.broadcast %cst_75 : f32 to vector<8x64xf32>
    %263 = arith.addf %262, %261 : vector<8x64xf32>
    %264 = arith.divf %262, %263 : vector<8x64xf32>
    %265 = vector.extract_strided_slice %11 {offsets = [48, 0], sizes = [8, 64], strides = [1, 1]} : vector<64x64xf32> to vector<8x64xf32>
    %266 = arith.addf %265, %255 : vector<8x64xf32>
    %267 = arith.negf %266 : vector<8x64xf32>
    %268 = math.exp %267 : vector<8x64xf32>
    %cst_76 = arith.constant 1.000000e+00 : f32
    %269 = vector.broadcast %cst_76 : f32 to vector<8x64xf32>
    %270 = arith.addf %269, %268 : vector<8x64xf32>
    %271 = arith.divf %269, %270 : vector<8x64xf32>
    %272 = vector.extract_strided_slice %16 {offsets = [48, 0], sizes = [8, 64], strides = [1, 1]} : vector<64x64xf32> to vector<8x64xf32>
    %273 = arith.mulf %264, %257 : vector<8x64xf32>
    %274 = arith.addf %272, %273 : vector<8x64xf32>
    %275 = math.tanh %274 : vector<8x64xf32>
    %cst_77 = arith.constant 1.000000e+00 : f32
    %276 = vector.broadcast %cst_77 : f32 to vector<8x64xf32>
    %277 = arith.subf %276, %271 : vector<8x64xf32>
    %278 = arith.mulf %277, %275 : vector<8x64xf32>
    %279 = arith.mulf %271, %251 : vector<8x64xf32>
    %280 = arith.addf %278, %279 : vector<8x64xf32>
    %281 = vector.extract_strided_slice %1 {offsets = [48, 0], sizes = [8, 1], strides = [1, 1]} : vector<64x1xf32> to vector<8x1xf32>
    %282 = vector.broadcast %281 : vector<8x1xf32> to vector<8x64xf32>
    %283 = arith.mulf %282, %280 : vector<8x64xf32>
    %cst_78 = arith.constant 1.000000e+00 : f32
    %284 = vector.broadcast %cst_78 : f32 to vector<8x1xf32>
    %285 = arith.subf %284, %281 : vector<8x1xf32>
    %286 = vector.broadcast %285 : vector<8x1xf32> to vector<8x64xf32>
    %287 = arith.mulf %286, %251 : vector<8x64xf32>
    %288 = arith.addf %283, %287 : vector<8x64xf32>
    %cst_79 = arith.constant dense<0.000000e+00> : vector<8x64xf32>
    %289 = tpu.matmul %288, %17, %cst_79 {dimension_numbers = #tpu.dot_dimension_numbers<[1], [0], [0], [1], [0, 0, 1, 1], [], []>} : vector<8x64xf32>, vector<64x64xf32>, vector<8x64xf32> -> vector<8x64xf32>
    %290 = arith.addf %289, %22 : vector<8x64xf32>
    %cst_80 = arith.constant dense<0.000000e+00> : vector<8x64xf32>
    %291 = tpu.matmul %288, %18, %cst_80 {dimension_numbers = #tpu.dot_dimension_numbers<[1], [0], [0], [1], [0, 0, 1, 1], [], []>} : vector<8x64xf32>, vector<64x64xf32>, vector<8x64xf32> -> vector<8x64xf32>
    %292 = arith.addf %291, %25 : vector<8x64xf32>
    %cst_81 = arith.constant dense<0.000000e+00> : vector<8x64xf32>
    %293 = tpu.matmul %288, %19, %cst_81 {dimension_numbers = #tpu.dot_dimension_numbers<[1], [0], [0], [1], [0, 0, 1, 1], [], []>} : vector<8x64xf32>, vector<64x64xf32>, vector<8x64xf32> -> vector<8x64xf32>
    %294 = arith.addf %293, %28 : vector<8x64xf32>
    %295 = vector.extract_strided_slice %6 {offsets = [56, 0], sizes = [8, 64], strides = [1, 1]} : vector<64x64xf32> to vector<8x64xf32>
    %296 = arith.addf %295, %290 : vector<8x64xf32>
    %297 = arith.negf %296 : vector<8x64xf32>
    %298 = math.exp %297 : vector<8x64xf32>
    %cst_82 = arith.constant 1.000000e+00 : f32
    %299 = vector.broadcast %cst_82 : f32 to vector<8x64xf32>
    %300 = arith.addf %299, %298 : vector<8x64xf32>
    %301 = arith.divf %299, %300 : vector<8x64xf32>
    %302 = vector.extract_strided_slice %11 {offsets = [56, 0], sizes = [8, 64], strides = [1, 1]} : vector<64x64xf32> to vector<8x64xf32>
    %303 = arith.addf %302, %292 : vector<8x64xf32>
    %304 = arith.negf %303 : vector<8x64xf32>
    %305 = math.exp %304 : vector<8x64xf32>
    %cst_83 = arith.constant 1.000000e+00 : f32
    %306 = vector.broadcast %cst_83 : f32 to vector<8x64xf32>
    %307 = arith.addf %306, %305 : vector<8x64xf32>
    %308 = arith.divf %306, %307 : vector<8x64xf32>
    %309 = vector.extract_strided_slice %16 {offsets = [56, 0], sizes = [8, 64], strides = [1, 1]} : vector<64x64xf32> to vector<8x64xf32>
    %310 = arith.mulf %301, %294 : vector<8x64xf32>
    %311 = arith.addf %309, %310 : vector<8x64xf32>
    %312 = math.tanh %311 : vector<8x64xf32>
    %cst_84 = arith.constant 1.000000e+00 : f32
    %313 = vector.broadcast %cst_84 : f32 to vector<8x64xf32>
    %314 = arith.subf %313, %308 : vector<8x64xf32>
    %315 = arith.mulf %314, %312 : vector<8x64xf32>
    %316 = arith.mulf %308, %288 : vector<8x64xf32>
    %317 = arith.addf %315, %316 : vector<8x64xf32>
    %318 = vector.extract_strided_slice %1 {offsets = [56, 0], sizes = [8, 1], strides = [1, 1]} : vector<64x1xf32> to vector<8x1xf32>
    %319 = vector.broadcast %318 : vector<8x1xf32> to vector<8x64xf32>
    %320 = arith.mulf %319, %317 : vector<8x64xf32>
    %cst_85 = arith.constant 1.000000e+00 : f32
    %321 = vector.broadcast %cst_85 : f32 to vector<8x1xf32>
    %322 = arith.subf %321, %318 : vector<8x1xf32>
    %323 = vector.broadcast %322 : vector<8x1xf32> to vector<8x64xf32>
    %324 = arith.mulf %323, %288 : vector<8x64xf32>
    %325 = arith.addf %320, %324 : vector<8x64xf32>
    %c0_86 = arith.constant 0 : index
    %c0_87 = arith.constant 0 : index
    %326 = vector.load %arg14[%c0_86, %c0_87] : memref<64x32xf32, #tpu.memory_space<vmem>>, vector<64x32xf32>
    %cst_88 = arith.constant dense<0.000000e+00> : vector<8x32xf32>
    %327 = tpu.matmul %325, %326, %cst_88 {dimension_numbers = #tpu.dot_dimension_numbers<[1], [0], [0], [1], [0, 0, 1, 1], [], []>} : vector<8x64xf32>, vector<64x32xf32>, vector<8x32xf32> -> vector<8x32xf32>
    %c0_89 = arith.constant 0 : index
    %c0_90 = arith.constant 0 : index
    %328 = vector.load %arg15[%c0_89, %c0_90] : memref<1x32xf32, #tpu.memory_space<vmem>>, vector<1x32xf32>
    %329 = vector.broadcast %328 : vector<1x32xf32> to vector<8x32xf32>
    %330 = arith.addf %327, %329 : vector<8x32xf32>
    %c0_91 = arith.constant 0 : index
    %c0_92 = arith.constant 0 : index
    %331 = vector.load %arg16[%c0_91, %c0_92] : memref<32x16xf32, #tpu.memory_space<vmem>>, vector<32x16xf32>
    %cst_93 = arith.constant dense<0.000000e+00> : vector<8x16xf32>
    %332 = tpu.matmul %330, %331, %cst_93 {dimension_numbers = #tpu.dot_dimension_numbers<[1], [0], [0], [1], [0, 0, 1, 1], [], []>} : vector<8x32xf32>, vector<32x16xf32>, vector<8x16xf32> -> vector<8x16xf32>
    %c0_94 = arith.constant 0 : index
    %c0_95 = arith.constant 0 : index
    %333 = vector.load %arg17[%c0_94, %c0_95] : memref<1x16xf32, #tpu.memory_space<vmem>>, vector<1x16xf32>
    %334 = vector.broadcast %333 : vector<1x16xf32> to vector<8x16xf32>
    %335 = arith.addf %332, %334 : vector<8x16xf32>
    %cst_96 = arith.constant dense<0xFF800000> : vector<8xf32>
    %336 = vector.multi_reduction <maximumf>, %335, %cst_96 [1] : vector<8x16xf32> to vector<8xf32>
    %337 = vector.shape_cast %336 : vector<8xf32> to vector<8x1xf32>
    %338 = vector.broadcast %337 : vector<8x1xf32> to vector<8x16xf32>
    %339 = arith.subf %335, %338 : vector<8x16xf32>
    %340 = math.exp %339 : vector<8x16xf32>
    %cst_97 = arith.constant dense<0.000000e+00> : vector<8xf32>
    %341 = vector.multi_reduction <add>, %340, %cst_97 [1] : vector<8x16xf32> to vector<8xf32>
    %342 = vector.shape_cast %341 : vector<8xf32> to vector<8x1xf32>
    %343 = tpu.reciprocal %342 {approx = true} : vector<8x1xf32> -> vector<8x1xf32>
    %344 = vector.broadcast %343 : vector<8x1xf32> to vector<8x16xf32>
    %345 = arith.mulf %340, %344 : vector<8x16xf32>
    %c0_98 = arith.constant 0 : index
    %c0_99 = arith.constant 0 : index
    %346 = vector.load %arg18[%c0_98, %c0_99] : memref<8x16xf32, #tpu.memory_space<vmem>>, vector<8x16xf32>
    tpu.vector_store %arg18[%c0_98, %c0_99], %345 {strides = array<i32>} : memref<8x16xf32, #tpu.memory_space<vmem>>, vector<8x16xf32>,
    return
  }
}

</mosaic_0001>

<llo_original>
// kernel: tpu_custom_call.1
$region0: #{tpu_custom_call.1}
  #allocation0 [shape = 'u32[]', space=smem, size = 0x4, offset = 0x4, fixed_abs, tag = 'smem constant byte address 0x4 - core index']
  #allocation1 [shape = 'u32[72,128]{1,0:T(1,128)}', space=vmem, size = 0x9000, scoped, tag = 'internal scratch']
  %s0 = inlined_call_operand.vmem [shape: f32[64,64], index: 0, kind: input, shape index: {}]
  %s1 = inlined_call_operand.vmem [shape: f32[64,1], index: 1, kind: input, shape index: {}]
  %s2 = inlined_call_operand.vmem [shape: f32[64,64], index: 2, kind: input, shape index: {}]
  %s3 = inlined_call_operand.hbm [shape: f32[64,64], index: 3, kind: input, shape index: {}]
  %s4 = inlined_call_operand.hbm [shape: f32[64,64], index: 4, kind: input, shape index: {}]
  %s5 = inlined_call_operand.hbm [shape: f32[64,64], index: 5, kind: input, shape index: {}]
  %s6 = inlined_call_operand.hbm [shape: f32[64,64], index: 6, kind: input, shape index: {}]
  %s7 = inlined_call_operand.hbm [shape: f32[64,64], index: 7, kind: input, shape index: {}]
  %s8 = inlined_call_operand.vmem [shape: f32[1,64], index: 8, kind: input, shape index: {}]
  %s9 = inlined_call_operand.vmem [shape: f32[1,64], index: 9, kind: input, shape index: {}]
  %s10 = inlined_call_operand.vmem [shape: f32[1,64], index: 10, kind: input, shape index: {}]
  %s11 = inlined_call_operand.vmem [shape: f32[1,64], index: 11, kind: input, shape index: {}]
  %s12 = inlined_call_operand.vmem [shape: f32[1,64], index: 12, kind: input, shape index: {}]
  %s13 = inlined_call_operand.vmem [shape: f32[1,64], index: 13, kind: input, shape index: {}]
  %s14 = inlined_call_operand.vmem [shape: f32[64,32], index: 14, kind: input, shape index: {}]
  %s15 = inlined_call_operand.vmem [shape: f32[1,32], index: 15, kind: input, shape index: {}]
  %s16 = inlined_call_operand.vmem [shape: f32[32,16], index: 16, kind: input, shape index: {}]
  %s17 = inlined_call_operand.vmem [shape: f32[1,16], index: 17, kind: input, shape index: {}]
  %s18 = inlined_call_operand.hbm [shape: f32[8,16], index: 18, kind: output, shape index: {}]
  %s19 = sld [smem:[#allocation0]]
  $region102: #{tpu_custom_call.1} parent=0
    _
  %s21 = ssub.s32 1, %s19
  %s22 = scalar_select 0, %s21, %s19
  $region1: #{tpu_custom_call.1} parent=0
    #allocation2 [shape = 'u8[32768]{0}', space=vmem, size = 0x8000, scoped, tag = 'input window, operand 3, single buffered']
    #allocation3 [shape = 's32[1]{0}', space=sflag, size = 0x4, scoped, tag = 'scoped memory for tpu_custom_call.1']
    #allocation4 [shape = 's32[1]{0}', space=sflag, size = 0x4, scoped, tag = 'scoped memory for tpu_custom_call.1']
    #allocation5 [shape = 'u8[32768]{0}', space=vmem, size = 0x8000, scoped, tag = 'input window, operand 4, single buffered']
    #allocation6 [shape = 's32[1]{0}', space=sflag, size = 0x4, scoped, tag = 'scoped memory for tpu_custom_call.1']
    #allocation7 [shape = 'u8[32768]{0}', space=vmem, size = 0x8000, scoped, tag = 'input window, operand 5, single buffered']
    #allocation8 [shape = 'u8[32768]{0}', space=vmem, size = 0x8000, scoped, tag = 'input window, operand 6, single buffered']
    #allocation9 [shape = 's32[1]{0}', space=sflag, size = 0x4, scoped, tag = 'scoped memory for tpu_custom_call.1']
    #allocation10 [shape = 'u8[32768]{0}', space=vmem, size = 0x8000, scoped, tag = 'input window, operand 7, single buffered']
    #allocation11 [shape = 'u8[4096]{0}', space=vmem, size = 0x1000, scoped, tag = 'output window, operand 0, single buffered']
    %23 = vsyncpa [#allocation3], 0
    %24 = vsyncpa [#allocation6], 0
    %25 = vsyncpa [#allocation9], 0
    %26 = vsyncpa [#allocation4], 0
    // Predicated region
    $region2: #{tpu_custom_call.1} parent=1 // pred_check
      _
    $region3: #{tpu_custom_call.1} parent=1 // pred_check_branch
      %28 = sbr.rel (0) target = $region5
    $region4: #{tpu_custom_call.1} parent=1 // pred_region
      _
    $region5: #{tpu_custom_call.1} parent=1 // pred_fallthru
      _
    // Predicated region
    $region6: #{tpu_custom_call.1} parent=1 // pred_check
      _
    $region7: #{tpu_custom_call.1} parent=1 // pred_check_branch
      %30 = sbr.rel (0) target = $region9
    $region8: #{tpu_custom_call.1} parent=1 // pred_region
      _
    $region9: #{tpu_custom_call.1} parent=1 // pred_fallthru
      _
    // Predicated region
    $region10: #{tpu_custom_call.1} parent=1 // pred_check
      _
    $region11: #{tpu_custom_call.1} parent=1 // pred_check_branch
      %32 = sbr.rel (0) target = $region13
    $region12: #{tpu_custom_call.1} parent=1 // pred_region
      _
    $region13: #{tpu_custom_call.1} parent=1 // pred_fallthru
      _
    // Predicated region
    $region14: #{tpu_custom_call.1} parent=1 // pred_check
      _
    $region15: #{tpu_custom_call.1} parent=1 // pred_check_branch
      %34 = sbr.rel (0) target = $region17
    $region16: #{tpu_custom_call.1} parent=1 // pred_region
      %36 = vsyncadd [#allocation3], 0
      %s37 = sshll.u32 %s3, 4
      %s38 = int_to_ptr.hbm [resolvable:$true] %s37
      %s39 = sshll.u32 [#allocation2], 4
      %s40 = int_to_ptr.vmem [resolvable:$true] %s39
      %45 = dma.hbm_to_vmem [thread:$0]  %s38, 1024, %s40, [#allocation3], 128, 128, 8
    $region17: #{tpu_custom_call.1} parent=1 // pred_fallthru
      _
    // Predicated region
    $region18: #{tpu_custom_call.1} parent=1 // pred_check
      _
    $region19: #{tpu_custom_call.1} parent=1 // pred_check_branch
      %47 = sbr.rel (0) target = $region21
    $region20: #{tpu_custom_call.1} parent=1 // pred_region
      %49 = vsyncadd [#allocation6], 0
      %s50 = sshll.u32 %s4, 4
      %s51 = int_to_ptr.hbm [resolvable:$true] %s50
      %s52 = sshll.u32 [#allocation5], 4
      %s53 = int_to_ptr.vmem [resolvable:$true] %s52
      %58 = dma.hbm_to_vmem [thread:$0]  %s51, 1024, %s53, [#allocation6], 128, 128, 8
    $region21: #{tpu_custom_call.1} parent=1 // pred_fallthru
      _
    // Predicated region
    $region22: #{tpu_custom_call.1} parent=1 // pred_check
      _
    $region23: #{tpu_custom_call.1} parent=1 // pred_check_branch
      %60 = sbr.rel (0) target = $region25
    $region24: #{tpu_custom_call.1} parent=1 // pred_region
      %62 = vsyncadd [#allocation6], 0
      %s63 = sshll.u32 %s5, 4
      %s64 = int_to_ptr.hbm [resolvable:$true] %s63
      %s65 = sshll.u32 [#allocation7], 4
      %s66 = int_to_ptr.vmem [resolvable:$true] %s65
      %71 = dma.hbm_to_vmem [thread:$0]  %s64, 1024, %s66, [#allocation6], 128, 128, 8
    $region25: #{tpu_custom_call.1} parent=1 // pred_fallthru
      _
    // Predicated region
    $region26: #{tpu_custom_call.1} parent=1 // pred_check
      _
    $region27: #{tpu_custom_call.1} parent=1 // pred_check_branch
      %73 = sbr.rel (0) target = $region29
    $region28: #{tpu_custom_call.1} parent=1 // pred_region
      %75 = vsyncadd [#allocation9], 0
      %s76 = sshll.u32 %s6, 4
      %s77 = int_to_ptr.hbm [resolvable:$true] %s76
      %s78 = sshll.u32 [#allocation8], 4
      %s79 = int_to_ptr.vmem [resolvable:$true] %s78
      %84 = dma.hbm_to_vmem [thread:$0]  %s77, 1024, %s79, [#allocation9], 128, 128, 8
    $region29: #{tpu_custom_call.1} parent=1 // pred_fallthru
      _
    // Predicated region
    $region30: #{tpu_custom_call.1} parent=1 // pred_check
      _
    $region31: #{tpu_custom_call.1} parent=1 // pred_check_branch
      %86 = sbr.rel (0) target = $region33
    $region32: #{tpu_custom_call.1} parent=1 // pred_region
      %88 = vsyncadd [#allocation9], 0
      %s89 = sshll.u32 %s7, 4
      %s90 = int_to_ptr.hbm [resolvable:$true] %s89
      %s91 = sshll.u32 [#allocation10], 4
      %s92 = int_to_ptr.vmem [resolvable:$true] %s91
      %97 = dma.hbm_to_vmem [thread:$0]  %s90, 1024, %s92, [#allocation9], 128, 128, 8
    $region33: #{tpu_custom_call.1} parent=1 // pred_fallthru
      _
    // Predicated region
    $region34: #{tpu_custom_call.1} parent=1 // pred_check
      _
    $region35: #{tpu_custom_call.1} parent=1 // pred_check_branch
      %99 = sbr.rel (0) target = $region37
    $region36: #{tpu_custom_call.1} parent=1 // pred_region
      _
    $region37: #{tpu_custom_call.1} parent=1 // pred_fallthru
      _
    // Predicated region
    $region38: #{tpu_custom_call.1} parent=1 // pred_check
      _
    $region39: #{tpu_custom_call.1} parent=1 // pred_check_branch
      %101 = sbr.rel (0) target = $region41
    $region40: #{tpu_custom_call.1} parent=1 // pred_region
      _
    $region41: #{tpu_custom_call.1} parent=1 // pred_fallthru
      _
    // Predicated region
    $region42: #{tpu_custom_call.1} parent=1 // pred_check
      _
    $region43: #{tpu_custom_call.1} parent=1 // pred_check_branch
      %103 = sbr.rel (0) target = $region45
    $region44: #{tpu_custom_call.1} parent=1 // pred_region
      _
    $region45: #{tpu_custom_call.1} parent=1 // pred_fallthru
      _
    // Predicated region
    $region46: #{tpu_custom_call.1} parent=1 // pred_check
      _
    $region47: #{tpu_custom_call.1} parent=1 // pred_check_branch
      %105 = sbr.rel (0) target = $region49
    $region48: #{tpu_custom_call.1} parent=1 // pred_region
      _
    $region49: #{tpu_custom_call.1} parent=1 // pred_fallthru
      _
    // Predicated region
    $region50: #{tpu_custom_call.1} parent=1 // pred_check
      _
    $region51: #{tpu_custom_call.1} parent=1 // pred_check_branch
      %107 = sbr.rel (0) target = $region53
    $region52: #{tpu_custom_call.1} parent=1 // pred_region
      _
    $region53: #{tpu_custom_call.1} parent=1 // pred_fallthru
      _
    // Predicated region
    $region54: #{tpu_custom_call.1} parent=1 // pred_check
      _
    $region55: #{tpu_custom_call.1} parent=1 // pred_check_branch
      %109 = sbr.rel (0) target = $region57
    $region56: #{tpu_custom_call.1} parent=1 // pred_region
      _
    $region57: #{tpu_custom_call.1} parent=1 // pred_fallthru
      _
    // Predicated region
    $region58: #{tpu_custom_call.1} parent=1 // pred_check
      _
    $region59: #{tpu_custom_call.1} parent=1 // pred_check_branch
      %111 = sbr.rel (0) target = $region61
    $region60: #{tpu_custom_call.1} parent=1 // pred_region
      _
    $region61: #{tpu_custom_call.1} parent=1 // pred_fallthru
      _
    // Predicated region
    $region62: #{tpu_custom_call.1} parent=1 // pred_check
      _
    $region63: #{tpu_custom_call.1} parent=1 // pred_check_branch
      %113 = sbr.rel (0) target = $region65
    $region64: #{tpu_custom_call.1} parent=1 // pred_region
      _
    $region65: #{tpu_custom_call.1} parent=1 // pred_fallthru
      _
    // Predicated region
    $region66: #{tpu_custom_call.1} parent=1 // pred_check
      _
    $region67: #{tpu_custom_call.1} parent=1 // pred_check_branch
      %115 = sbr.rel (0) target = $region69
    $region68: #{tpu_custom_call.1} parent=1 // pred_region
      _
    $region69: #{tpu_custom_call.1} parent=1 // pred_fallthru
      _
    // Predicated region
    $region70: #{tpu_custom_call.1} parent=1 // pred_check
      _
    $region71: #{tpu_custom_call.1} parent=1 // pred_check_branch
      %117 = sbr.rel (0) target = $region73
    $region72: #{tpu_custom_call.1} parent=1 // pred_region
      _
    $region73: #{tpu_custom_call.1} parent=1 // pred_fallthru
      _
    // Predicated region
    $region74: #{tpu_custom_call.1} parent=1 // pred_check
      _
    $region75: #{tpu_custom_call.1} parent=1 // pred_check_branch
      %119 = sbr.rel (0) target = $region77
    $region76: #{tpu_custom_call.1} parent=1 // pred_region
      %121 = dma.done [#allocation3], 1024
    $region77: #{tpu_custom_call.1} parent=1 // pred_fallthru
      _
    // Predicated region
    $region78: #{tpu_custom_call.1} parent=1 // pred_check
      _
    $region79: #{tpu_custom_call.1} parent=1 // pred_check_branch
      %123 = sbr.rel (0) target = $region81
    $region80: #{tpu_custom_call.1} parent=1 // pred_region
      %125 = dma.done [#allocation6], 1024
    $region81: #{tpu_custom_call.1} parent=1 // pred_fallthru
      _
    // Predicated region
    $region82: #{tpu_custom_call.1} parent=1 // pred_check
      _
    $region83: #{tpu_custom_call.1} parent=1 // pred_check_branch
      %127 = sbr.rel (0) target = $region85
    $region84: #{tpu_custom_call.1} parent=1 // pred_region
      %129 = dma.done [#allocation6], 1024
    $region85: #{tpu_custom_call.1} parent=1 // pred_fallthru
      _
    // Predicated region
    $region86: #{tpu_custom_call.1} parent=1 // pred_check
      _
    $region87: #{tpu_custom_call.1} parent=1 // pred_check_branch
      %131 = sbr.rel (0) target = $region89
    $region88: #{tpu_custom_call.1} parent=1 // pred_region
      %133 = dma.done [#allocation9], 1024
    $region89: #{tpu_custom_call.1} parent=1 // pred_fallthru
      _
    // Predicated region
    $region90: #{tpu_custom_call.1} parent=1 // pred_check
      _
    $region91: #{tpu_custom_call.1} parent=1 // pred_check_branch
      %135 = sbr.rel (0) target = $region93
    $region92: #{tpu_custom_call.1} parent=1 // pred_region
      %137 = dma.done [#allocation9], 1024
    $region93: #{tpu_custom_call.1} parent=1 // pred_fallthru
      _
    %v138 = vld [vmem:[%s0] sm:$0xff]
    %v139 = vld [vmem:[%s0 + $0x8] sm:$0xff]
    %v140 = vld [vmem:[%s0 + $0x10] sm:$0xff]
    %v141 = vld [vmem:[%s0 + $0x18] sm:$0xff]
    %v142 = vld [vmem:[%s0 + $0x20] sm:$0xff]
    %v143 = vld [vmem:[%s0 + $0x28] sm:$0xff]
    %v144 = vld [vmem:[%s0 + $0x30] sm:$0xff]
    %v145 = vld [vmem:[%s0 + $0x38] sm:$0xff]
    %v146 = vld [vmem:[%s1] sm:$0xff]
    %v147 = vld [vmem:[%s1 + $0x8] sm:$0xff]
    %v148 = vld [vmem:[%s1 + $0x10] sm:$0xff]
    %v149 = vld [vmem:[%s1 + $0x18] sm:$0xff]
    %v150 = vld [vmem:[%s1 + $0x20] sm:$0xff]
    %v151 = vld [vmem:[%s1 + $0x28] sm:$0xff]
    %v152 = vld [vmem:[%s1 + $0x30] sm:$0xff]
    %v153 = vld [vmem:[%s1 + $0x38] sm:$0xff]
    %v154 = vld [vmem:[%s2] sm:$0xff]
    %v155 = vld [vmem:[%s2 + $0x8] sm:$0xff]
    %v156 = vld [vmem:[%s2 + $0x10] sm:$0xff]
    %v157 = vld [vmem:[%s2 + $0x18] sm:$0xff]
    %v158 = vld [vmem:[%s2 + $0x20] sm:$0xff]
    %v159 = vld [vmem:[%s2 + $0x28] sm:$0xff]
    %v160 = vld [vmem:[%s2 + $0x30] sm:$0xff]
    %v161 = vld [vmem:[%s2 + $0x38] sm:$0xff]
    %v162 = vld [vmem:[%s8] sm:$0x1]
    %v164 = vperm.slane %v162, 0
    %vm166 = vcmask 523264
    %v168 = vsel %vm166, %v138, 0
    %v171 = vsel %vm166, %v139, 0
    %v174 = vsel %vm166, %v140, 0
    %v177 = vsel %vm166, %v141, 0
    %v180 = vsel %vm166, %v142, 0
    %v183 = vsel %vm166, %v143, 0
    %v186 = vsel %vm166, %v144, 0
    %v189 = vsel %vm166, %v145, 0
    %191 = vmatpush.msra.mxu0 0.0
    %192 = vmatpush.msra.mxu0 0.0
    %193 = vmatpush.msra.mxu0 0.0
    %194 = vmatpush.msra.mxu0 0.0
    %195 = vmatpush.msra.mxu0 0.0
    %196 = vmatpush.msra.mxu0 0.0
    %197 = vmatpush.msra.mxu0 0.0
    %198 = vmatpush.msra.mxu0 0.0
    %199 = vmatpush.msra.mxu0 %v161
    %200 = vmatpush.msra.mxu0 %v160
    %201 = vmatpush.msra.mxu0 %v159
    %202 = vmatpush.msra.mxu0 %v158
    %203 = vmatpush.msra.mxu0 %v157
    %204 = vmatpush.msra.mxu0 %v156
    %205 = vmatpush.msra.mxu0 %v155
    %206 = vmatpush.msra.mxu0 %v154
    %207 = vmatmul.f32.gmra.mxu0 %v168
    %v208 = vpop.f32.mrf.mxu0
    %v209 = vadd.f32 %v164, %v208
    %210 = vmatmul.f32.gmra.mxu0 %v171
    %v211 = vpop.f32.mrf.mxu0
    %v212 = vadd.f32 %v164, %v211
    %213 = vmatmul.f32.gmra.mxu0 %v174
    %v214 = vpop.f32.mrf.mxu0
    %v215 = vadd.f32 %v164, %v214
    %216 = vmatmul.f32.gmra.mxu0 %v177
    %v217 = vpop.f32.mrf.mxu0
    %v218 = vadd.f32 %v164, %v217
    %219 = vmatmul.f32.gmra.mxu0 %v180
    %v220 = vpop.f32.mrf.mxu0
    %v221 = vadd.f32 %v164, %v220
    %222 = vmatmul.f32.gmra.mxu0 %v183
    %v223 = vpop.f32.mrf.mxu0
    %v224 = vadd.f32 %v164, %v223
    %225 = vmatmul.f32.gmra.mxu0 %v186
    %v226 = vpop.f32.mrf.mxu0
    %v227 = vadd.f32 %v164, %v226
    %228 = vmatmul.f32.gmra.mxu0 %v189
    %v229 = vpop.f32.mrf.mxu0
    %v230 = vadd.f32 %v164, %v229
    %231 = vdwg.mxu0
    %v232 = vld [vmem:[#allocation2] sm:$0xff]
    %v233 = vld [vmem:[#allocation2 + $0x8] sm:$0xff]
    %v234 = vld [vmem:[#allocation2 + $0x10] sm:$0xff]
    %v235 = vld [vmem:[#allocation2 + $0x18] sm:$0xff]
    %v236 = vld [vmem:[#allocation2 + $0x20] sm:$0xff]
    %v237 = vld [vmem:[#allocation2 + $0x28] sm:$0xff]
    %v238 = vld [vmem:[#allocation2 + $0x30] sm:$0xff]
    %v239 = vld [vmem:[#allocation2 + $0x38] sm:$0xff]
    %v240 = vld [vmem:[%s9] sm:$0x1]
    %v242 = vperm.slane %v240, 0
    %244 = vmatpush.msra.mxu0 0.0
    %245 = vmatpush.msra.mxu0 0.0
    %246 = vmatpush.msra.mxu0 0.0
    %247 = vmatpush.msra.mxu0 0.0
    %248 = vmatpush.msra.mxu0 0.0
    %249 = vmatpush.msra.mxu0 0.0
    %250 = vmatpush.msra.mxu0 0.0
    %251 = vmatpush.msra.mxu0 0.0
    %252 = vmatpush.msra.mxu0 %v239
    %253 = vmatpush.msra.mxu0 %v238
    %254 = vmatpush.msra.mxu0 %v237
    %255 = vmatpush.msra.mxu0 %v236
    %256 = vmatpush.msra.mxu0 %v235
    %257 = vmatpush.msra.mxu0 %v234
    %258 = vmatpush.msra.mxu0 %v233
    %259 = vmatpush.msra.mxu0 %v232
    %260 = vmatmul.f32.gmra.mxu0 %v168
    %v261 = vpop.f32.mrf.mxu0
    %v262 = vadd.f32 %v242, %v261
    %263 = vmatmul.f32.gmra.mxu0 %v171
    %v264 = vpop.f32.mrf.mxu0
    %v265 = vadd.f32 %v242, %v264
    %266 = vmatmul.f32.gmra.mxu0 %v174
    %v267 = vpop.f32.mrf.mxu0
    %v268 = vadd.f32 %v242, %v267
    %269 = vmatmul.f32.gmra.mxu0 %v177
    %v270 = vpop.f32.mrf.mxu0
    %v271 = vadd.f32 %v242, %v270
    %272 = vmatmul.f32.gmra.mxu0 %v180
    %v273 = vpop.f32.mrf.mxu0
    %v274 = vadd.f32 %v242, %v273
    %275 = vmatmul.f32.gmra.mxu0 %v183
    %v276 = vpop.f32.mrf.mxu0
    %v277 = vadd.f32 %v242, %v276
    %278 = vmatmul.f32.gmra.mxu0 %v186
    %v279 = vpop.f32.mrf.mxu0
    %v280 = vadd.f32 %v242, %v279
    %281 = vmatmul.f32.gmra.mxu0 %v189
    %v282 = vpop.f32.mrf.mxu0
    %v283 = vadd.f32 %v242, %v282
    %284 = vdwg.mxu0
    %v285 = vld [vmem:[#allocation5] sm:$0xff]
    %v286 = vld [vmem:[#allocation5 + $0x8] sm:$0xff]
    %v287 = vld [vmem:[#allocation5 + $0x10] sm:$0xff]
    %v288 = vld [vmem:[#allocation5 + $0x18] sm:$0xff]
    %v289 = vld [vmem:[#allocation5 + $0x20] sm:$0xff]
    %v290 = vld [vmem:[#allocation5 + $0x28] sm:$0xff]
    %v291 = vld [vmem:[#allocation5 + $0x30] sm:$0xff]
    %v292 = vld [vmem:[#allocation5 + $0x38] sm:$0xff]
    %v293 = vld [vmem:[%s10] sm:$0x1]
    %v295 = vperm.slane %v293, 0
    %297 = vmatpush.msra.mxu0 0.0
    %298 = vmatpush.msra.mxu0 0.0
    %299 = vmatpush.msra.mxu0 0.0
    %300 = vmatpush.msra.mxu0 0.0
    %301 = vmatpush.msra.mxu0 0.0
    %302 = vmatpush.msra.mxu0 0.0
    %303 = vmatpush.msra.mxu0 0.0
    %304 = vmatpush.msra.mxu0 0.0
    %305 = vmatpush.msra.mxu0 %v292
    %306 = vmatpush.msra.mxu0 %v291
    %307 = vmatpush.msra.mxu0 %v290
    %308 = vmatpush.msra.mxu0 %v289
    %309 = vmatpush.msra.mxu0 %v288
    %310 = vmatpush.msra.mxu0 %v287
    %311 = vmatpush.msra.mxu0 %v286
    %312 = vmatpush.msra.mxu0 %v285
    %313 = vmatmul.f32.gmra.mxu0 %v168
    %v314 = vpop.f32.mrf.mxu0
    %v315 = vadd.f32 %v295, %v314
    %316 = vmatmul.f32.gmra.mxu0 %v171
    %v317 = vpop.f32.mrf.mxu0
    %v318 = vadd.f32 %v295, %v317
    %319 = vmatmul.f32.gmra.mxu0 %v174
    %v320 = vpop.f32.mrf.mxu0
    %v321 = vadd.f32 %v295, %v320
    %322 = vmatmul.f32.gmra.mxu0 %v177
    %v323 = vpop.f32.mrf.mxu0
    %v324 = vadd.f32 %v295, %v323
    %325 = vmatmul.f32.gmra.mxu0 %v180
    %v326 = vpop.f32.mrf.mxu0
    %v327 = vadd.f32 %v295, %v326
    %328 = vmatmul.f32.gmra.mxu0 %v183
    %v329 = vpop.f32.mrf.mxu0
    %v330 = vadd.f32 %v295, %v329
    %331 = vmatmul.f32.gmra.mxu0 %v186
    %v332 = vpop.f32.mrf.mxu0
    %v333 = vadd.f32 %v295, %v332
    %334 = vmatmul.f32.gmra.mxu0 %v189
    %v335 = vpop.f32.mrf.mxu0
    %v336 = vadd.f32 %v295, %v335
    %337 = vdwg.mxu0
    %v338 = vld [vmem:[#allocation7] sm:$0xff]
    %v339 = vld [vmem:[#allocation7 + $0x8] sm:$0xff]
    %v340 = vld [vmem:[#allocation7 + $0x10] sm:$0xff]
    %v341 = vld [vmem:[#allocation7 + $0x18] sm:$0xff]
    %v342 = vld [vmem:[#allocation7 + $0x20] sm:$0xff]
    %v343 = vld [vmem:[#allocation7 + $0x28] sm:$0xff]
    %v344 = vld [vmem:[#allocation7 + $0x30] sm:$0xff]
    %v345 = vld [vmem:[#allocation7 + $0x38] sm:$0xff]
    %v346 = vld [vmem:[#allocation8] sm:$0xff]
    %v347 = vld [vmem:[#allocation8 + $0x8] sm:$0xff]
    %v348 = vld [vmem:[#allocation8 + $0x10] sm:$0xff]
    %v349 = vld [vmem:[#allocation8 + $0x18] sm:$0xff]
    %v350 = vld [vmem:[#allocation8 + $0x20] sm:$0xff]
    %v351 = vld [vmem:[#allocation8 + $0x28] sm:$0xff]
    %v352 = vld [vmem:[#allocation8 + $0x30] sm:$0xff]
    %v353 = vld [vmem:[#allocation8 + $0x38] sm:$0xff]
    %v354 = vld [vmem:[#allocation10] sm:$0xff]
    %v355 = vld [vmem:[#allocation10 + $0x8] sm:$0xff]
    %v356 = vld [vmem:[#allocation10 + $0x10] sm:$0xff]
    %v357 = vld [vmem:[#allocation10 + $0x18] sm:$0xff]
    %v358 = vld [vmem:[#allocation10 + $0x20] sm:$0xff]
    %v359 = vld [vmem:[#allocation10 + $0x28] sm:$0xff]
    %v360 = vld [vmem:[#allocation10 + $0x30] sm:$0xff]
    %v361 = vld [vmem:[#allocation10 + $0x38] sm:$0xff]
    %v362 = vld [vmem:[%s11] sm:$0x1]
    %v364 = vperm.slane %v362, 0
    %v366 = vld [vmem:[%s12] sm:$0x1]
    %v368 = vperm.slane %v366, 0
    %v370 = vld [vmem:[%s13] sm:$0x1]
    %v372 = vperm.slane %v370, 0
    %v375 = vsel %vm166, 0.0, 0
    %377 = vmatpush.msra.mxu0 0.0
    %378 = vmatpush.msra.mxu0 0.0
    %379 = vmatpush.msra.mxu0 0.0
    %380 = vmatpush.msra.mxu0 0.0
    %381 = vmatpush.msra.mxu0 0.0
    %382 = vmatpush.msra.mxu0 0.0
    %383 = vmatpush.msra.mxu0 0.0
    %384 = vmatpush.msra.mxu0 0.0
    %385 = vmatpush.msra.mxu0 %v345
    %386 = vmatpush.msra.mxu0 %v344
    %387 = vmatpush.msra.mxu0 %v343
    %388 = vmatpush.msra.mxu0 %v342
    %389 = vmatpush.msra.mxu0 %v341
    %390 = vmatpush.msra.mxu0 %v340
    %391 = vmatpush.msra.mxu0 %v339
    %392 = vmatpush.msra.mxu0 %v338
    %393 = vmatmul.f32.gmra.mxu0 %v375
    %v394 = vpop.f32.mrf.mxu0
    %v395 = vadd.f32 %v364, %v394
    %396 = vdwg.mxu0
    %397 = vmatpush.msra.mxu0 0.0
    %398 = vmatpush.msra.mxu0 0.0
    %399 = vmatpush.msra.mxu0 0.0
    %400 = vmatpush.msra.mxu0 0.0
    %401 = vmatpush.msra.mxu0 0.0
    %402 = vmatpush.msra.mxu0 0.0
    %403 = vmatpush.msra.mxu0 0.0
    %404 = vmatpush.msra.mxu0 0.0
    %405 = vmatpush.msra.mxu0 %v353
    %406 = vmatpush.msra.mxu0 %v352
    %407 = vmatpush.msra.mxu0 %v351
    %408 = vmatpush.msra.mxu0 %v350
    %409 = vmatpush.msra.mxu0 %v349
    %410 = vmatpush.msra.mxu0 %v348
    %411 = vmatpush.msra.mxu0 %v347
    %412 = vmatpush.msra.mxu0 %v346
    %413 = vmatmul.f32.gmra.mxu0 %v375
    %v414 = vpop.f32.mrf.mxu0
    %v415 = vadd.f32 %v368, %v414
    %416 = vdwg.mxu0
    %417 = vmatpush.msra.mxu0 0.0
    %418 = vmatpush.msra.mxu0 0.0
    %419 = vmatpush.msra.mxu0 0.0
    %420 = vmatpush.msra.mxu0 0.0
    %421 = vmatpush.msra.mxu0 0.0
    %422 = vmatpush.msra.mxu0 0.0
    %423 = vmatpush.msra.mxu0 0.0
    %424 = vmatpush.msra.mxu0 0.0
    %425 = vmatpush.msra.mxu0 %v361
    %426 = vmatpush.msra.mxu0 %v360
    %427 = vmatpush.msra.mxu0 %v359
    %428 = vmatpush.msra.mxu0 %v358
    %429 = vmatpush.msra.mxu0 %v357
    %430 = vmatpush.msra.mxu0 %v356
    %431 = vmatpush.msra.mxu0 %v355
    %432 = vmatpush.msra.mxu0 %v354
    %433 = vmatmul.f32.gmra.mxu0 %v375
    %v434 = vpop.f32.mrf.mxu0
    %v435 = vadd.f32 %v372, %v434
    %436 = vdwg.mxu0
    %v437 = vadd.f32 %v209, %v395
    %v438 = vxor.u32 %v437, 2147483648
    %v439 = vmul.f32 %v438, 1.442695
    %v440 = vpow.pop %v439
    %v441 = vadd.f32 %v440, 1.0
    %v442 = vrcp.pop %v441
    %v443 = vmul.f32 %v441, %v442
    %v444 = vsub.f32 1.0, %v443
    %v445 = vmul.f32 %v442, %v444
    %v446 = vadd.f32 %v442, %v445
    %vm447 = vweird.f32 %v441
    %vm448 = vweird.f32 %v442
    %vm449 = vmor %vm447, %vm448
    %v450 = vsel %vm449, %v442, %v446
    %v451 = vand.u32 2147483647, %v441
    %vm452 = vcmp.eq.f32.partialorder %v451, 8.507059e+37
    %v453 = vand.u32 %v441, 2147483648
    %v454 = vor.u32 1.1754944e-38, %v453
    %v455 = vsel %vm452, %v454, %v450
    %v456 = vmul.f32 1.0, %v455
    %v457 = vadd.f32 %v262, %v415
    %v458 = vxor.u32 %v457, 2147483648
    %v459 = vmul.f32 %v458, 1.442695
    %v460 = vpow.pop %v459
    %v461 = vadd.f32 %v460, 1.0
    %v462 = vrcp.pop %v461
    %v463 = vmul.f32 %v461, %v462
    %v464 = vsub.f32 1.0, %v463
    %v465 = vmul.f32 %v462, %v464
    %v466 = vadd.f32 %v462, %v465
    %vm467 = vweird.f32 %v461
    %vm468 = vweird.f32 %v462
    %vm469 = vmor %vm467, %vm468
    %v470 = vsel %vm469, %v462, %v466
    %v471 = vand.u32 2147483647, %v461
    %vm472 = vcmp.eq.f32.partialorder %v471, 8.507059e+37
    %v473 = vand.u32 %v461, 2147483648
    %v474 = vor.u32 1.1754944e-38, %v473
    %v475 = vsel %vm472, %v474, %v470
    %v476 = vmul.f32 1.0, %v475
    %v477 = vmul.f32 %v456, %v435
    %v478 = vadd.f32 %v315, %v477
    %v479 = vtanh.pop %v478
    %v480 = vsub.f32 1.0, %v476
    %v481 = vmul.f32 %v480, %v479
    %v482 = vmul.f32 %v476, 0.0
    %v483 = vadd.f32 %v481, %v482
    %485 = vset.pattern.permute.xlu0 0
    %486 = vperm.xlu0 %485, %v146
    %v487 = vpop.permute.xlu0 %486
    %v489 = vmul.f32 %v487, %v483
    %v490 = vsub.f32 1.0, %v146
    %492 = vset.pattern.permute.xlu0 0
    %493 = vperm.xlu0 %492, %v490
    %v494 = vpop.permute.xlu0 %493
    %v496 = vmul.f32 %v494, 0.0
    %v497 = vadd.f32 %v489, %v496
    %v499 = vsel %vm166, %v497, 0
    %501 = vmatpush.msra.mxu0 0.0
    %502 = vmatpush.msra.mxu0 0.0
    %503 = vmatpush.msra.mxu0 0.0
    %504 = vmatpush.msra.mxu0 0.0
    %505 = vmatpush.msra.mxu0 0.0
    %506 = vmatpush.msra.mxu0 0.0
    %507 = vmatpush.msra.mxu0 0.0
    %508 = vmatpush.msra.mxu0 0.0
    %509 = vmatpush.msra.mxu0 %v345
    %510 = vmatpush.msra.mxu0 %v344
    %511 = vmatpush.msra.mxu0 %v343
    %512 = vmatpush.msra.mxu0 %v342
    %513 = vmatpush.msra.mxu0 %v341
    %514 = vmatpush.msra.mxu0 %v340
    %515 = vmatpush.msra.mxu0 %v339
    %516 = vmatpush.msra.mxu0 %v338
    %517 = vmatmul.f32.gmra.mxu0 %v499
    %v518 = vpop.f32.mrf.mxu0
    %v519 = vadd.f32 %v364, %v518
    %520 = vdwg.mxu0
    %521 = vmatpush.msra.mxu0 0.0
    %522 = vmatpush.msra.mxu0 0.0
    %523 = vmatpush.msra.mxu0 0.0
    %524 = vmatpush.msra.mxu0 0.0
    %525 = vmatpush.msra.mxu0 0.0
    %526 = vmatpush.msra.mxu0 0.0
    %527 = vmatpush.msra.mxu0 0.0
    %528 = vmatpush.msra.mxu0 0.0
    %529 = vmatpush.msra.mxu0 %v353
    %530 = vmatpush.msra.mxu0 %v352
    %531 = vmatpush.msra.mxu0 %v351
    %532 = vmatpush.msra.mxu0 %v350
    %533 = vmatpush.msra.mxu0 %v349
    %534 = vmatpush.msra.mxu0 %v348
    %535 = vmatpush.msra.mxu0 %v347
    %536 = vmatpush.msra.mxu0 %v346
    %537 = vmatmul.f32.gmra.mxu0 %v499
    %v538 = vpop.f32.mrf.mxu0
    %v539 = vadd.f32 %v368, %v538
    %540 = vdwg.mxu0
    %541 = vmatpush.msra.mxu0 0.0
    %542 = vmatpush.msra.mxu0 0.0
    %543 = vmatpush.msra.mxu0 0.0
    %544 = vmatpush.msra.mxu0 0.0
    %545 = vmatpush.msra.mxu0 0.0
    %546 = vmatpush.msra.mxu0 0.0
    %547 = vmatpush.msra.mxu0 0.0
    %548 = vmatpush.msra.mxu0 0.0
    %549 = vmatpush.msra.mxu0 %v361
    %550 = vmatpush.msra.mxu0 %v360
    %551 = vmatpush.msra.mxu0 %v359
    %552 = vmatpush.msra.mxu0 %v358
    %553 = vmatpush.msra.mxu0 %v357
    %554 = vmatpush.msra.mxu0 %v356
    %555 = vmatpush.msra.mxu0 %v355
    %556 = vmatpush.msra.mxu0 %v354
    %557 = vmatmul.f32.gmra.mxu0 %v499
    %v558 = vpop.f32.mrf.mxu0
    %v559 = vadd.f32 %v372, %v558
    %560 = vdwg.mxu0
    %v561 = vadd.f32 %v212, %v519
    %v562 = vxor.u32 %v561, 2147483648
    %v563 = vmul.f32 %v562, 1.442695
    %v564 = vpow.pop %v563
    %v565 = vadd.f32 %v564, 1.0
    %v566 = vrcp.pop %v565
    %v567 = vmul.f32 %v565, %v566
    %v568 = vsub.f32 1.0, %v567
    %v569 = vmul.f32 %v566, %v568
    %v570 = vadd.f32 %v566, %v569
    %vm571 = vweird.f32 %v565
    %vm572 = vweird.f32 %v566
    %vm573 = vmor %vm571, %vm572
    %v574 = vsel %vm573, %v566, %v570
    %v575 = vand.u32 2147483647, %v565
    %vm576 = vcmp.eq.f32.partialorder %v575, 8.507059e+37
    %v577 = vand.u32 %v565, 2147483648
    %v578 = vor.u32 1.1754944e-38, %v577
    %v579 = vsel %vm576, %v578, %v574
    %v580 = vmul.f32 1.0, %v579
    %v581 = vadd.f32 %v265, %v539
    %v582 = vxor.u32 %v581, 2147483648
    %v583 = vmul.f32 %v582, 1.442695
    %v584 = vpow.pop %v583
    %v585 = vadd.f32 %v584, 1.0
    %v586 = vrcp.pop %v585
    %v587 = vmul.f32 %v585, %v586
    %v588 = vsub.f32 1.0, %v587
    %v589 = vmul.f32 %v586, %v588
    %v590 = vadd.f32 %v586, %v589
    %vm591 = vweird.f32 %v585
    %vm592 = vweird.f32 %v586
    %vm593 = vmor %vm591, %vm592
    %v594 = vsel %vm593, %v586, %v590
    %v595 = vand.u32 2147483647, %v585
    %vm596 = vcmp.eq.f32.partialorder %v595, 8.507059e+37
    %v597 = vand.u32 %v585, 2147483648
    %v598 = vor.u32 1.1754944e-38, %v597
    %v599 = vsel %vm596, %v598, %v594
    %v600 = vmul.f32 1.0, %v599
    %v601 = vmul.f32 %v580, %v559
    %v602 = vadd.f32 %v318, %v601
    %v603 = vtanh.pop %v602
    %v604 = vsub.f32 1.0, %v600
    %v605 = vmul.f32 %v604, %v603
    %v606 = vmul.f32 %v600, %v497
    %v607 = vadd.f32 %v605, %v606
    %609 = vset.pattern.permute.xlu0 0
    %610 = vperm.xlu0 %609, %v147
    %v611 = vpop.permute.xlu0 %610
    %v613 = vmul.f32 %v611, %v607
    %v614 = vsub.f32 1.0, %v147
    %616 = vset.pattern.permute.xlu0 0
    %617 = vperm.xlu0 %616, %v614
    %v618 = vpop.permute.xlu0 %617
    %v620 = vmul.f32 %v618, %v497
    %v621 = vadd.f32 %v613, %v620
    %v623 = vsel %vm166, %v621, 0
    %625 = vmatpush.msra.mxu0 0.0
    %626 = vmatpush.msra.mxu0 0.0
    %627 = vmatpush.msra.mxu0 0.0
    %628 = vmatpush.msra.mxu0 0.0
    %629 = vmatpush.msra.mxu0 0.0
    %630 = vmatpush.msra.mxu0 0.0
    %631 = vmatpush.msra.mxu0 0.0
    %632 = vmatpush.msra.mxu0 0.0
    %633 = vmatpush.msra.mxu0 %v345
    %634 = vmatpush.msra.mxu0 %v344
    %635 = vmatpush.msra.mxu0 %v343
    %636 = vmatpush.msra.mxu0 %v342
    %637 = vmatpush.msra.mxu0 %v341
    %638 = vmatpush.msra.mxu0 %v340
    %639 = vmatpush.msra.mxu0 %v339
    %640 = vmatpush.msra.mxu0 %v338
    %641 = vmatmul.f32.gmra.mxu0 %v623
    %v642 = vpop.f32.mrf.mxu0
    %v643 = vadd.f32 %v364, %v642
    %644 = vdwg.mxu0
    %645 = vmatpush.msra.mxu0 0.0
    %646 = vmatpush.msra.mxu0 0.0
    %647 = vmatpush.msra.mxu0 0.0
    %648 = vmatpush.msra.mxu0 0.0
    %649 = vmatpush.msra.mxu0 0.0
    %650 = vmatpush.msra.mxu0 0.0
    %651 = vmatpush.msra.mxu0 0.0
    %652 = vmatpush.msra.mxu0 0.0
    %653 = vmatpush.msra.mxu0 %v353
    %654 = vmatpush.msra.mxu0 %v352
    %655 = vmatpush.msra.mxu0 %v351
    %656 = vmatpush.msra.mxu0 %v350
    %657 = vmatpush.msra.mxu0 %v349
    %658 = vmatpush.msra.mxu0 %v348
    %659 = vmatpush.msra.mxu0 %v347
    %660 = vmatpush.msra.mxu0 %v346
    %661 = vmatmul.f32.gmra.mxu0 %v623
    %v662 = vpop.f32.mrf.mxu0
    %v663 = vadd.f32 %v368, %v662
    %664 = vdwg.mxu0
    %665 = vmatpush.msra.mxu0 0.0
    %666 = vmatpush.msra.mxu0 0.0
    %667 = vmatpush.msra.mxu0 0.0
    %668 = vmatpush.msra.mxu0 0.0
    %669 = vmatpush.msra.mxu0 0.0
    %670 = vmatpush.msra.mxu0 0.0
    %671 = vmatpush.msra.mxu0 0.0
    %672 = vmatpush.msra.mxu0 0.0
    %673 = vmatpush.msra.mxu0 %v361
    %674 = vmatpush.msra.mxu0 %v360
    %675 = vmatpush.msra.mxu0 %v359
    %676 = vmatpush.msra.mxu0 %v358
    %677 = vmatpush.msra.mxu0 %v357
    %678 = vmatpush.msra.mxu0 %v356
    %679 = vmatpush.msra.mxu0 %v355
    %680 = vmatpush.msra.mxu0 %v354
    %681 = vmatmul.f32.gmra.mxu0 %v623
    %v682 = vpop.f32.mrf.mxu0
    %v683 = vadd.f32 %v372, %v682
    %684 = vdwg.mxu0
    %v685 = vadd.f32 %v215, %v643
    %v686 = vxor.u32 %v685, 2147483648
    %v687 = vmul.f32 %v686, 1.442695
    %v688 = vpow.pop %v687
    %v689 = vadd.f32 %v688, 1.0
    %v690 = vrcp.pop %v689
    %v691 = vmul.f32 %v689, %v690
    %v692 = vsub.f32 1.0, %v691
    %v693 = vmul.f32 %v690, %v692
    %v694 = vadd.f32 %v690, %v693
    %vm695 = vweird.f32 %v689
    %vm696 = vweird.f32 %v690
    %vm697 = vmor %vm695, %vm696
    %v698 = vsel %vm697, %v690, %v694
    %v699 = vand.u32 2147483647, %v689
    %vm700 = vcmp.eq.f32.partialorder %v699, 8.507059e+37
    %v701 = vand.u32 %v689, 2147483648
    %v702 = vor.u32 1.1754944e-38, %v701
    %v703 = vsel %vm700, %v702, %v698
    %v704 = vmul.f32 1.0, %v703
    %v705 = vadd.f32 %v268, %v663
    %v706 = vxor.u32 %v705, 2147483648
    %v707 = vmul.f32 %v706, 1.442695
    %v708 = vpow.pop %v707
    %v709 = vadd.f32 %v708, 1.0
    %v710 = vrcp.pop %v709
    %v711 = vmul.f32 %v709, %v710
    %v712 = vsub.f32 1.0, %v711
    %v713 = vmul.f32 %v710, %v712
    %v714 = vadd.f32 %v710, %v713
    %vm715 = vweird.f32 %v709
    %vm716 = vweird.f32 %v710
    %vm717 = vmor %vm715, %vm716
    %v718 = vsel %vm717, %v710, %v714
    %v719 = vand.u32 2147483647, %v709
    %vm720 = vcmp.eq.f32.partialorder %v719, 8.507059e+37
    %v721 = vand.u32 %v709, 2147483648
    %v722 = vor.u32 1.1754944e-38, %v721
    %v723 = vsel %vm720, %v722, %v718
    %v724 = vmul.f32 1.0, %v723
    %v725 = vmul.f32 %v704, %v683
    %v726 = vadd.f32 %v321, %v725
    %v727 = vtanh.pop %v726
    %v728 = vsub.f32 1.0, %v724
    %v729 = vmul.f32 %v728, %v727
    %v730 = vmul.f32 %v724, %v621
    %v731 = vadd.f32 %v729, %v730
    %733 = vset.pattern.permute.xlu0 0
    %734 = vperm.xlu0 %733, %v148
    %v735 = vpop.permute.xlu0 %734
    %v737 = vmul.f32 %v735, %v731
    %v738 = vsub.f32 1.0, %v148
    %740 = vset.pattern.permute.xlu0 0
    %741 = vperm.xlu0 %740, %v738
    %v742 = vpop.permute.xlu0 %741
    %v744 = vmul.f32 %v742, %v621
    %v745 = vadd.f32 %v737, %v744
    %v747 = vsel %vm166, %v745, 0
    %749 = vmatpush.msra.mxu0 0.0
    %750 = vmatpush.msra.mxu0 0.0
    %751 = vmatpush.msra.mxu0 0.0
    %752 = vmatpush.msra.mxu0 0.0
    %753 = vmatpush.msra.mxu0 0.0
    %754 = vmatpush.msra.mxu0 0.0
    %755 = vmatpush.msra.mxu0 0.0
    %756 = vmatpush.msra.mxu0 0.0
    %757 = vmatpush.msra.mxu0 %v345
    %758 = vmatpush.msra.mxu0 %v344
    %759 = vmatpush.msra.mxu0 %v343
    %760 = vmatpush.msra.mxu0 %v342
    %761 = vmatpush.msra.mxu0 %v341
    %762 = vmatpush.msra.mxu0 %v340
    %763 = vmatpush.msra.mxu0 %v339
    %764 = vmatpush.msra.mxu0 %v338
    %765 = vmatmul.f32.gmra.mxu0 %v747
    %v766 = vpop.f32.mrf.mxu0
    %v767 = vadd.f32 %v364, %v766
    %768 = vdwg.mxu0
    %769 = vmatpush.msra.mxu0 0.0
    %770 = vmatpush.msra.mxu0 0.0
    %771 = vmatpush.msra.mxu0 0.0
    %772 = vmatpush.msra.mxu0 0.0
    %773 = vmatpush.msra.mxu0 0.0
    %774 = vmatpush.msra.mxu0 0.0
    %775 = vmatpush.msra.mxu0 0.0
    %776 = vmatpush.msra.mxu0 0.0
    %777 = vmatpush.msra.mxu0 %v353
    %778 = vmatpush.msra.mxu0 %v352
    %779 = vmatpush.msra.mxu0 %v351
    %780 = vmatpush.msra.mxu0 %v350
    %781 = vmatpush.msra.mxu0 %v349
    %782 = vmatpush.msra.mxu0 %v348
    %783 = vmatpush.msra.mxu0 %v347
    %784 = vmatpush.msra.mxu0 %v346
    %785 = vmatmul.f32.gmra.mxu0 %v747
    %v786 = vpop.f32.mrf.mxu0
    %v787 = vadd.f32 %v368, %v786
    %788 = vdwg.mxu0
    %789 = vmatpush.msra.mxu0 0.0
    %790 = vmatpush.msra.mxu0 0.0
    %791 = vmatpush.msra.mxu0 0.0
    %792 = vmatpush.msra.mxu0 0.0
    %793 = vmatpush.msra.mxu0 0.0
    %794 = vmatpush.msra.mxu0 0.0
    %795 = vmatpush.msra.mxu0 0.0
    %796 = vmatpush.msra.mxu0 0.0
    %797 = vmatpush.msra.mxu0 %v361
    %798 = vmatpush.msra.mxu0 %v360
    %799 = vmatpush.msra.mxu0 %v359
    %800 = vmatpush.msra.mxu0 %v358
    %801 = vmatpush.msra.mxu0 %v357
    %802 = vmatpush.msra.mxu0 %v356
    %803 = vmatpush.msra.mxu0 %v355
    %804 = vmatpush.msra.mxu0 %v354
    %805 = vmatmul.f32.gmra.mxu0 %v747
    %v806 = vpop.f32.mrf.mxu0
    %v807 = vadd.f32 %v372, %v806
    %808 = vdwg.mxu0
    %v809 = vadd.f32 %v218, %v767
    %v810 = vxor.u32 %v809, 2147483648
    %v811 = vmul.f32 %v810, 1.442695
    %v812 = vpow.pop %v811
    %v813 = vadd.f32 %v812, 1.0
    %v814 = vrcp.pop %v813
    %v815 = vmul.f32 %v813, %v814
    %v816 = vsub.f32 1.0, %v815
    %v817 = vmul.f32 %v814, %v816
    %v818 = vadd.f32 %v814, %v817
    %vm819 = vweird.f32 %v813
    %vm820 = vweird.f32 %v814
    %vm821 = vmor %vm819, %vm820
    %v822 = vsel %vm821, %v814, %v818
    %v823 = vand.u32 2147483647, %v813
    %vm824 = vcmp.eq.f32.partialorder %v823, 8.507059e+37
    %v825 = vand.u32 %v813, 2147483648
    %v826 = vor.u32 1.1754944e-38, %v825
    %v827 = vsel %vm824, %v826, %v822
    %v828 = vmul.f32 1.0, %v827
    %v829 = vadd.f32 %v271, %v787
    %v830 = vxor.u32 %v829, 2147483648
    %v831 = vmul.f32 %v830, 1.442695
    %v832 = vpow.pop %v831
    %v833 = vadd.f32 %v832, 1.0
    %v834 = vrcp.pop %v833
    %v835 = vmul.f32 %v833, %v834
    %v836 = vsub.f32 1.0, %v835
    %v837 = vmul.f32 %v834, %v836
    %v838 = vadd.f32 %v834, %v837
    %vm839 = vweird.f32 %v833
    %vm840 = vweird.f32 %v834
    %vm841 = vmor %vm839, %vm840
    %v842 = vsel %vm841, %v834, %v838
    %v843 = vand.u32 2147483647, %v833
    %vm844 = vcmp.eq.f32.partialorder %v843, 8.507059e+37
    %v845 = vand.u32 %v833, 2147483648
    %v846 = vor.u32 1.1754944e-38, %v845
    %v847 = vsel %vm844, %v846, %v842
    %v848 = vmul.f32 1.0, %v847
    %v849 = vmul.f32 %v828, %v807
    %v850 = vadd.f32 %v324, %v849
    %v851 = vtanh.pop %v850
    %v852 = vsub.f32 1.0, %v848
    %v853 = vmul.f32 %v852, %v851
    %v854 = vmul.f32 %v848, %v745
    %v855 = vadd.f32 %v853, %v854
    %857 = vset.pattern.permute.xlu0 0
    %858 = vperm.xlu0 %857, %v149
    %v859 = vpop.permute.xlu0 %858
    %v861 = vmul.f32 %v859, %v855
    %v862 = vsub.f32 1.0, %v149
    %864 = vset.pattern.permute.xlu0 0
    %865 = vperm.xlu0 %864, %v862
    %v866 = vpop.permute.xlu0 %865
    %v868 = vmul.f32 %v866, %v745
    %v869 = vadd.f32 %v861, %v868
    %v871 = vsel %vm166, %v869, 0
    %873 = vmatpush.msra.mxu0 0.0
    %874 = vmatpush.msra.mxu0 0.0
    %875 = vmatpush.msra.mxu0 0.0
    %876 = vmatpush.msra.mxu0 0.0
    %877 = vmatpush.msra.mxu0 0.0
    %878 = vmatpush.msra.mxu0 0.0
    %879 = vmatpush.msra.mxu0 0.0
    %880 = vmatpush.msra.mxu0 0.0
    %881 = vmatpush.msra.mxu0 %v345
    %882 = vmatpush.msra.mxu0 %v344
    %883 = vmatpush.msra.mxu0 %v343
    %884 = vmatpush.msra.mxu0 %v342
    %885 = vmatpush.msra.mxu0 %v341
    %886 = vmatpush.msra.mxu0 %v340
    %887 = vmatpush.msra.mxu0 %v339
    %888 = vmatpush.msra.mxu0 %v338
    %889 = vmatmul.f32.gmra.mxu0 %v871
    %v890 = vpop.f32.mrf.mxu0
    %v891 = vadd.f32 %v364, %v890
    %892 = vdwg.mxu0
    %893 = vmatpush.msra.mxu0 0.0
    %894 = vmatpush.msra.mxu0 0.0
    %895 = vmatpush.msra.mxu0 0.0
    %896 = vmatpush.msra.mxu0 0.0
    %897 = vmatpush.msra.mxu0 0.0
    %898 = vmatpush.msra.mxu0 0.0
    %899 = vmatpush.msra.mxu0 0.0
    %900 = vmatpush.msra.mxu0 0.0
    %901 = vmatpush.msra.mxu0 %v353
    %902 = vmatpush.msra.mxu0 %v352
    %903 = vmatpush.msra.mxu0 %v351
    %904 = vmatpush.msra.mxu0 %v350
    %905 = vmatpush.msra.mxu0 %v349
    %906 = vmatpush.msra.mxu0 %v348
    %907 = vmatpush.msra.mxu0 %v347
    %908 = vmatpush.msra.mxu0 %v346
    %909 = vmatmul.f32.gmra.mxu0 %v871
    %v910 = vpop.f32.mrf.mxu0
    %v911 = vadd.f32 %v368, %v910
    %912 = vdwg.mxu0
    %913 = vmatpush.msra.mxu0 0.0
    %914 = vmatpush.msra.mxu0 0.0
    %915 = vmatpush.msra.mxu0 0.0
    %916 = vmatpush.msra.mxu0 0.0
    %917 = vmatpush.msra.mxu0 0.0
    %918 = vmatpush.msra.mxu0 0.0
    %919 = vmatpush.msra.mxu0 0.0
    %920 = vmatpush.msra.mxu0 0.0
    %921 = vmatpush.msra.mxu0 %v361
    %922 = vmatpush.msra.mxu0 %v360
    %923 = vmatpush.msra.mxu0 %v359
    %924 = vmatpush.msra.mxu0 %v358
    %925 = vmatpush.msra.mxu0 %v357
    %926 = vmatpush.msra.mxu0 %v356
    %927 = vmatpush.msra.mxu0 %v355
    %928 = vmatpush.msra.mxu0 %v354
    %929 = vmatmul.f32.gmra.mxu0 %v871
    %v930 = vpop.f32.mrf.mxu0
    %v931 = vadd.f32 %v372, %v930
    %932 = vdwg.mxu0
    %v933 = vadd.f32 %v221, %v891
    %v934 = vxor.u32 %v933, 2147483648
    %v935 = vmul.f32 %v934, 1.442695
    %v936 = vpow.pop %v935
    %v937 = vadd.f32 %v936, 1.0
    %v938 = vrcp.pop %v937
    %v939 = vmul.f32 %v937, %v938
    %v940 = vsub.f32 1.0, %v939
    %v941 = vmul.f32 %v938, %v940
    %v942 = vadd.f32 %v938, %v941
    %vm943 = vweird.f32 %v937
    %vm944 = vweird.f32 %v938
    %vm945 = vmor %vm943, %vm944
    %v946 = vsel %vm945, %v938, %v942
    %v947 = vand.u32 2147483647, %v937
    %vm948 = vcmp.eq.f32.partialorder %v947, 8.507059e+37
    %v949 = vand.u32 %v937, 2147483648
    %v950 = vor.u32 1.1754944e-38, %v949
    %v951 = vsel %vm948, %v950, %v946
    %v952 = vmul.f32 1.0, %v951
    %v953 = vadd.f32 %v274, %v911
    %v954 = vxor.u32 %v953, 2147483648
    %v955 = vmul.f32 %v954, 1.442695
    %v956 = vpow.pop %v955
    %v957 = vadd.f32 %v956, 1.0
    %v958 = vrcp.pop %v957
    %v959 = vmul.f32 %v957, %v958
    %v960 = vsub.f32 1.0, %v959
    %v961 = vmul.f32 %v958, %v960
    %v962 = vadd.f32 %v958, %v961
    %vm963 = vweird.f32 %v957
    %vm964 = vweird.f32 %v958
    %vm965 = vmor %vm963, %vm964
    %v966 = vsel %vm965, %v958, %v962
    %v967 = vand.u32 2147483647, %v957
    %vm968 = vcmp.eq.f32.partialorder %v967, 8.507059e+37
    %v969 = vand.u32 %v957, 2147483648
    %v970 = vor.u32 1.1754944e-38, %v969
    %v971 = vsel %vm968, %v970, %v966
    %v972 = vmul.f32 1.0, %v971
    %v973 = vmul.f32 %v952, %v931
    %v974 = vadd.f32 %v327, %v973
    %v975 = vtanh.pop %v974
    %v976 = vsub.f32 1.0, %v972
    %v977 = vmul.f32 %v976, %v975
    %v978 = vmul.f32 %v972, %v869
    %v979 = vadd.f32 %v977, %v978
    %981 = vset.pattern.permute.xlu0 0
    %982 = vperm.xlu0 %981, %v150
    %v983 = vpop.permute.xlu0 %982
    %v985 = vmul.f32 %v983, %v979
    %v986 = vsub.f32 1.0, %v150
    %988 = vset.pattern.permute.xlu0 0
    %989 = vperm.xlu0 %988, %v986
    %v990 = vpop.permute.xlu0 %989
    %v992 = vmul.f32 %v990, %v869
    %v993 = vadd.f32 %v985, %v992
    %v995 = vsel %vm166, %v993, 0
    %997 = vmatpush.msra.mxu0 0.0
    %998 = vmatpush.msra.mxu0 0.0
    %999 = vmatpush.msra.mxu0 0.0
    %1000 = vmatpush.msra.mxu0 0.0
    %1001 = vmatpush.msra.mxu0 0.0
    %1002 = vmatpush.msra.mxu0 0.0
    %1003 = vmatpush.msra.mxu0 0.0
    %1004 = vmatpush.msra.mxu0 0.0
    %1005 = vmatpush.msra.mxu0 %v345
    %1006 = vmatpush.msra.mxu0 %v344
    %1007 = vmatpush.msra.mxu0 %v343
    %1008 = vmatpush.msra.mxu0 %v342
    %1009 = vmatpush.msra.mxu0 %v341
    %1010 = vmatpush.msra.mxu0 %v340
    %1011 = vmatpush.msra.mxu0 %v339
    %1012 = vmatpush.msra.mxu0 %v338
    %1013 = vmatmul.f32.gmra.mxu0 %v995
    %v1014 = vpop.f32.mrf.mxu0
    %v1015 = vadd.f32 %v364, %v1014
    %1016 = vdwg.mxu0
    %1017 = vmatpush.msra.mxu0 0.0
    %1018 = vmatpush.msra.mxu0 0.0
    %1019 = vmatpush.msra.mxu0 0.0
    %1020 = vmatpush.msra.mxu0 0.0
    %1021 = vmatpush.msra.mxu0 0.0
    %1022 = vmatpush.msra.mxu0 0.0
    %1023 = vmatpush.msra.mxu0 0.0
    %1024 = vmatpush.msra.mxu0 0.0
    %1025 = vmatpush.msra.mxu0 %v353
    %1026 = vmatpush.msra.mxu0 %v352
    %1027 = vmatpush.msra.mxu0 %v351
    %1028 = vmatpush.msra.mxu0 %v350
    %1029 = vmatpush.msra.mxu0 %v349
    %1030 = vmatpush.msra.mxu0 %v348
    %1031 = vmatpush.msra.mxu0 %v347
    %1032 = vmatpush.msra.mxu0 %v346
    %1033 = vmatmul.f32.gmra.mxu0 %v995
    %v1034 = vpop.f32.mrf.mxu0
    %v1035 = vadd.f32 %v368, %v1034
    %1036 = vdwg.mxu0
    %1037 = vmatpush.msra.mxu0 0.0
    %1038 = vmatpush.msra.mxu0 0.0
    %1039 = vmatpush.msra.mxu0 0.0
    %1040 = vmatpush.msra.mxu0 0.0
    %1041 = vmatpush.msra.mxu0 0.0
    %1042 = vmatpush.msra.mxu0 0.0
    %1043 = vmatpush.msra.mxu0 0.0
    %1044 = vmatpush.msra.mxu0 0.0
    %1045 = vmatpush.msra.mxu0 %v361
    %1046 = vmatpush.msra.mxu0 %v360
    %1047 = vmatpush.msra.mxu0 %v359
    %1048 = vmatpush.msra.mxu0 %v358
    %1049 = vmatpush.msra.mxu0 %v357
    %1050 = vmatpush.msra.mxu0 %v356
    %1051 = vmatpush.msra.mxu0 %v355
    %1052 = vmatpush.msra.mxu0 %v354
    %1053 = vmatmul.f32.gmra.mxu0 %v995
    %v1054 = vpop.f32.mrf.mxu0
    %v1055 = vadd.f32 %v372, %v1054
    %1056 = vdwg.mxu0
    %v1057 = vadd.f32 %v224, %v1015
    %v1058 = vxor.u32 %v1057, 2147483648
    %v1059 = vmul.f32 %v1058, 1.442695
    %v1060 = vpow.pop %v1059
    %v1061 = vadd.f32 %v1060, 1.0
    %v1062 = vrcp.pop %v1061
    %v1063 = vmul.f32 %v1061, %v1062
    %v1064 = vsub.f32 1.0, %v1063
    %v1065 = vmul.f32 %v1062, %v1064
    %v1066 = vadd.f32 %v1062, %v1065
    %vm1067 = vweird.f32 %v1061
    %vm1068 = vweird.f32 %v1062
    %vm1069 = vmor %vm1067, %vm1068
    %v1070 = vsel %vm1069, %v1062, %v1066
    %v1071 = vand.u32 2147483647, %v1061
    %vm1072 = vcmp.eq.f32.partialorder %v1071, 8.507059e+37
    %v1073 = vand.u32 %v1061, 2147483648
    %v1074 = vor.u32 1.1754944e-38, %v1073
    %v1075 = vsel %vm1072, %v1074, %v1070
    %v1076 = vmul.f32 1.0, %v1075
    %v1077 = vadd.f32 %v277, %v1035
    %v1078 = vxor.u32 %v1077, 2147483648
    %v1079 = vmul.f32 %v1078, 1.442695
    %v1080 = vpow.pop %v1079
    %v1081 = vadd.f32 %v1080, 1.0
    %v1082 = vrcp.pop %v1081
    %v1083 = vmul.f32 %v1081, %v1082
    %v1084 = vsub.f32 1.0, %v1083
    %v1085 = vmul.f32 %v1082, %v1084
    %v1086 = vadd.f32 %v1082, %v1085
    %vm1087 = vweird.f32 %v1081
    %vm1088 = vweird.f32 %v1082
    %vm1089 = vmor %vm1087, %vm1088
    %v1090 = vsel %vm1089, %v1082, %v1086
    %v1091 = vand.u32 2147483647, %v1081
    %vm1092 = vcmp.eq.f32.partialorder %v1091, 8.507059e+37
    %v1093 = vand.u32 %v1081, 2147483648
    %v1094 = vor.u32 1.1754944e-38, %v1093
    %v1095 = vsel %vm1092, %v1094, %v1090
    %v1096 = vmul.f32 1.0, %v1095
    %v1097 = vmul.f32 %v1076, %v1055
    %v1098 = vadd.f32 %v330, %v1097
    %v1099 = vtanh.pop %v1098
    %v1100 = vsub.f32 1.0, %v1096
    %v1101 = vmul.f32 %v1100, %v1099
    %v1102 = vmul.f32 %v1096, %v993
    %v1103 = vadd.f32 %v1101, %v1102
    %1105 = vset.pattern.permute.xlu0 0
    %1106 = vperm.xlu0 %1105, %v151
    %v1107 = vpop.permute.xlu0 %1106
    %v1109 = vmul.f32 %v1107, %v1103
    %v1110 = vsub.f32 1.0, %v151
    %1112 = vset.pattern.permute.xlu0 0
    %1113 = vperm.xlu0 %1112, %v1110
    %v1114 = vpop.permute.xlu0 %1113
    %v1116 = vmul.f32 %v1114, %v993
    %v1117 = vadd.f32 %v1109, %v1116
    %v1119 = vsel %vm166, %v1117, 0
    %1121 = vmatpush.msra.mxu0 0.0
    %1122 = vmatpush.msra.mxu0 0.0
    %1123 = vmatpush.msra.mxu0 0.0
    %1124 = vmatpush.msra.mxu0 0.0
    %1125 = vmatpush.msra.mxu0 0.0
    %1126 = vmatpush.msra.mxu0 0.0
    %1127 = vmatpush.msra.mxu0 0.0
    %1128 = vmatpush.msra.mxu0 0.0
    %1129 = vmatpush.msra.mxu0 %v345
    %1130 = vmatpush.msra.mxu0 %v344
    %1131 = vmatpush.msra.mxu0 %v343
    %1132 = vmatpush.msra.mxu0 %v342
    %1133 = vmatpush.msra.mxu0 %v341
    %1134 = vmatpush.msra.mxu0 %v340
    %1135 = vmatpush.msra.mxu0 %v339
    %1136 = vmatpush.msra.mxu0 %v338
    %1137 = vmatmul.f32.gmra.mxu0 %v1119
    %v1138 = vpop.f32.mrf.mxu0
    %v1139 = vadd.f32 %v364, %v1138
    %1140 = vdwg.mxu0
    %1141 = vmatpush.msra.mxu0 0.0
    %1142 = vmatpush.msra.mxu0 0.0
    %1143 = vmatpush.msra.mxu0 0.0
    %1144 = vmatpush.msra.mxu0 0.0
    %1145 = vmatpush.msra.mxu0 0.0
    %1146 = vmatpush.msra.mxu0 0.0
    %1147 = vmatpush.msra.mxu0 0.0
    %1148 = vmatpush.msra.mxu0 0.0
    %1149 = vmatpush.msra.mxu0 %v353
    %1150 = vmatpush.msra.mxu0 %v352
    %1151 = vmatpush.msra.mxu0 %v351
    %1152 = vmatpush.msra.mxu0 %v350
    %1153 = vmatpush.msra.mxu0 %v349
    %1154 = vmatpush.msra.mxu0 %v348
    %1155 = vmatpush.msra.mxu0 %v347
    %1156 = vmatpush.msra.mxu0 %v346
    %1157 = vmatmul.f32.gmra.mxu0 %v1119
    %v1158 = vpop.f32.mrf.mxu0
    %v1159 = vadd.f32 %v368, %v1158
    %1160 = vdwg.mxu0
    %1161 = vmatpush.msra.mxu0 0.0
    %1162 = vmatpush.msra.mxu0 0.0
    %1163 = vmatpush.msra.mxu0 0.0
    %1164 = vmatpush.msra.mxu0 0.0
    %1165 = vmatpush.msra.mxu0 0.0
    %1166 = vmatpush.msra.mxu0 0.0
    %1167 = vmatpush.msra.mxu0 0.0
    %1168 = vmatpush.msra.mxu0 0.0
    %1169 = vmatpush.msra.mxu0 %v361
    %1170 = vmatpush.msra.mxu0 %v360
    %1171 = vmatpush.msra.mxu0 %v359
    %1172 = vmatpush.msra.mxu0 %v358
    %1173 = vmatpush.msra.mxu0 %v357
    %1174 = vmatpush.msra.mxu0 %v356
    %1175 = vmatpush.msra.mxu0 %v355
    %1176 = vmatpush.msra.mxu0 %v354
    %1177 = vmatmul.f32.gmra.mxu0 %v1119
    %v1178 = vpop.f32.mrf.mxu0
    %v1179 = vadd.f32 %v372, %v1178
    %1180 = vdwg.mxu0
    %v1181 = vadd.f32 %v227, %v1139
    %v1182 = vxor.u32 %v1181, 2147483648
    %v1183 = vmul.f32 %v1182, 1.442695
    %v1184 = vpow.pop %v1183
    %v1185 = vadd.f32 %v1184, 1.0
    %v1186 = vrcp.pop %v1185
    %v1187 = vmul.f32 %v1185, %v1186
    %v1188 = vsub.f32 1.0, %v1187
    %v1189 = vmul.f32 %v1186, %v1188
    %v1190 = vadd.f32 %v1186, %v1189
    %vm1191 = vweird.f32 %v1185
    %vm1192 = vweird.f32 %v1186
    %vm1193 = vmor %vm1191, %vm1192
    %v1194 = vsel %vm1193, %v1186, %v1190
    %v1195 = vand.u32 2147483647, %v1185
    %vm1196 = vcmp.eq.f32.partialorder %v1195, 8.507059e+37
    %v1197 = vand.u32 %v1185, 2147483648
    %v1198 = vor.u32 1.1754944e-38, %v1197
    %v1199 = vsel %vm1196, %v1198, %v1194
    %v1200 = vmul.f32 1.0, %v1199
    %v1201 = vadd.f32 %v280, %v1159
    %v1202 = vxor.u32 %v1201, 2147483648
    %v1203 = vmul.f32 %v1202, 1.442695
    %v1204 = vpow.pop %v1203
    %v1205 = vadd.f32 %v1204, 1.0
    %v1206 = vrcp.pop %v1205
    %v1207 = vmul.f32 %v1205, %v1206
    %v1208 = vsub.f32 1.0, %v1207
    %v1209 = vmul.f32 %v1206, %v1208
    %v1210 = vadd.f32 %v1206, %v1209
    %vm1211 = vweird.f32 %v1205
    %vm1212 = vweird.f32 %v1206
    %vm1213 = vmor %vm1211, %vm1212
    %v1214 = vsel %vm1213, %v1206, %v1210
    %v1215 = vand.u32 2147483647, %v1205
    %vm1216 = vcmp.eq.f32.partialorder %v1215, 8.507059e+37
    %v1217 = vand.u32 %v1205, 2147483648
    %v1218 = vor.u32 1.1754944e-38, %v1217
    %v1219 = vsel %vm1216, %v1218, %v1214
    %v1220 = vmul.f32 1.0, %v1219
    %v1221 = vmul.f32 %v1200, %v1179
    %v1222 = vadd.f32 %v333, %v1221
    %v1223 = vtanh.pop %v1222
    %v1224 = vsub.f32 1.0, %v1220
    %v1225 = vmul.f32 %v1224, %v1223
    %v1226 = vmul.f32 %v1220, %v1117
    %v1227 = vadd.f32 %v1225, %v1226
    %1229 = vset.pattern.permute.xlu0 0
    %1230 = vperm.xlu0 %1229, %v152
    %v1231 = vpop.permute.xlu0 %1230
    %v1233 = vmul.f32 %v1231, %v1227
    %v1234 = vsub.f32 1.0, %v152
    %1236 = vset.pattern.permute.xlu0 0
    %1237 = vperm.xlu0 %1236, %v1234
    %v1238 = vpop.permute.xlu0 %1237
    %v1240 = vmul.f32 %v1238, %v1117
    %v1241 = vadd.f32 %v1233, %v1240
    %v1243 = vsel %vm166, %v1241, 0
    %1245 = vmatpush.msra.mxu0 0.0
    %1246 = vmatpush.msra.mxu0 0.0
    %1247 = vmatpush.msra.mxu0 0.0
    %1248 = vmatpush.msra.mxu0 0.0
    %1249 = vmatpush.msra.mxu0 0.0
    %1250 = vmatpush.msra.mxu0 0.0
    %1251 = vmatpush.msra.mxu0 0.0
    %1252 = vmatpush.msra.mxu0 0.0
    %1253 = vmatpush.msra.mxu0 %v345
    %1254 = vmatpush.msra.mxu0 %v344
    %1255 = vmatpush.msra.mxu0 %v343
    %1256 = vmatpush.msra.mxu0 %v342
    %1257 = vmatpush.msra.mxu0 %v341
    %1258 = vmatpush.msra.mxu0 %v340
    %1259 = vmatpush.msra.mxu0 %v339
    %1260 = vmatpush.msra.mxu0 %v338
    %1261 = vmatmul.f32.gmra.mxu0 %v1243
    %v1262 = vpop.f32.mrf.mxu0
    %v1263 = vadd.f32 %v364, %v1262
    %1264 = vdwg.mxu0
    %1265 = vmatpush.msra.mxu0 0.0
    %1266 = vmatpush.msra.mxu0 0.0
    %1267 = vmatpush.msra.mxu0 0.0
    %1268 = vmatpush.msra.mxu0 0.0
    %1269 = vmatpush.msra.mxu0 0.0
    %1270 = vmatpush.msra.mxu0 0.0
    %1271 = vmatpush.msra.mxu0 0.0
    %1272 = vmatpush.msra.mxu0 0.0
    %1273 = vmatpush.msra.mxu0 %v353
    %1274 = vmatpush.msra.mxu0 %v352
    %1275 = vmatpush.msra.mxu0 %v351
    %1276 = vmatpush.msra.mxu0 %v350
    %1277 = vmatpush.msra.mxu0 %v349
    %1278 = vmatpush.msra.mxu0 %v348
    %1279 = vmatpush.msra.mxu0 %v347
    %1280 = vmatpush.msra.mxu0 %v346
    %1281 = vmatmul.f32.gmra.mxu0 %v1243
    %v1282 = vpop.f32.mrf.mxu0
    %v1283 = vadd.f32 %v368, %v1282
    %1284 = vdwg.mxu0
    %1285 = vmatpush.msra.mxu0 0.0
    %1286 = vmatpush.msra.mxu0 0.0
    %1287 = vmatpush.msra.mxu0 0.0
    %1288 = vmatpush.msra.mxu0 0.0
    %1289 = vmatpush.msra.mxu0 0.0
    %1290 = vmatpush.msra.mxu0 0.0
    %1291 = vmatpush.msra.mxu0 0.0
    %1292 = vmatpush.msra.mxu0 0.0
    %1293 = vmatpush.msra.mxu0 %v361
    %1294 = vmatpush.msra.mxu0 %v360
    %1295 = vmatpush.msra.mxu0 %v359
    %1296 = vmatpush.msra.mxu0 %v358
    %1297 = vmatpush.msra.mxu0 %v357
    %1298 = vmatpush.msra.mxu0 %v356
    %1299 = vmatpush.msra.mxu0 %v355
    %1300 = vmatpush.msra.mxu0 %v354
    %1301 = vmatmul.f32.gmra.mxu0 %v1243
    %v1302 = vpop.f32.mrf.mxu0
    %v1303 = vadd.f32 %v372, %v1302
    %1304 = vdwg.mxu0
    %v1305 = vadd.f32 %v230, %v1263
    %v1306 = vxor.u32 %v1305, 2147483648
    %v1307 = vmul.f32 %v1306, 1.442695
    %v1308 = vpow.pop %v1307
    %v1309 = vadd.f32 %v1308, 1.0
    %v1310 = vrcp.pop %v1309
    %v1311 = vmul.f32 %v1309, %v1310
    %v1312 = vsub.f32 1.0, %v1311
    %v1313 = vmul.f32 %v1310, %v1312
    %v1314 = vadd.f32 %v1310, %v1313
    %vm1315 = vweird.f32 %v1309
    %vm1316 = vweird.f32 %v1310
    %vm1317 = vmor %vm1315, %vm1316
    %v1318 = vsel %vm1317, %v1310, %v1314
    %v1319 = vand.u32 2147483647, %v1309
    %vm1320 = vcmp.eq.f32.partialorder %v1319, 8.507059e+37
    %v1321 = vand.u32 %v1309, 2147483648
    %v1322 = vor.u32 1.1754944e-38, %v1321
    %v1323 = vsel %vm1320, %v1322, %v1318
    %v1324 = vmul.f32 1.0, %v1323
    %v1325 = vadd.f32 %v283, %v1283
    %v1326 = vxor.u32 %v1325, 2147483648
    %v1327 = vmul.f32 %v1326, 1.442695
    %v1328 = vpow.pop %v1327
    %v1329 = vadd.f32 %v1328, 1.0
    %v1330 = vrcp.pop %v1329
    %v1331 = vmul.f32 %v1329, %v1330
    %v1332 = vsub.f32 1.0, %v1331
    %v1333 = vmul.f32 %v1330, %v1332
    %v1334 = vadd.f32 %v1330, %v1333
    %vm1335 = vweird.f32 %v1329
    %vm1336 = vweird.f32 %v1330
    %vm1337 = vmor %vm1335, %vm1336
    %v1338 = vsel %vm1337, %v1330, %v1334
    %v1339 = vand.u32 2147483647, %v1329
    %vm1340 = vcmp.eq.f32.partialorder %v1339, 8.507059e+37
    %v1341 = vand.u32 %v1329, 2147483648
    %v1342 = vor.u32 1.1754944e-38, %v1341
    %v1343 = vsel %vm1340, %v1342, %v1338
    %v1344 = vmul.f32 1.0, %v1343
    %v1345 = vmul.f32 %v1324, %v1303
    %v1346 = vadd.f32 %v336, %v1345
    %v1347 = vtanh.pop %v1346
    %v1348 = vsub.f32 1.0, %v1344
    %v1349 = vmul.f32 %v1348, %v1347
    %v1350 = vmul.f32 %v1344, %v1241
    %v1351 = vadd.f32 %v1349, %v1350
    %1353 = vset.pattern.permute.xlu0 0
    %1354 = vperm.xlu0 %1353, %v153
    %v1355 = vpop.permute.xlu0 %1354
    %v1357 = vmul.f32 %v1355, %v1351
    %v1358 = vsub.f32 1.0, %v153
    %1360 = vset.pattern.permute.xlu0 0
    %1361 = vperm.xlu0 %1360, %v1358
    %v1362 = vpop.permute.xlu0 %1361
    %v1364 = vmul.f32 %v1362, %v1241
    %v1365 = vadd.f32 %v1357, %v1364
    %v1366 = vld [vmem:[%s14] sm:$0xff]
    %v1367 = vld [vmem:[%s14 + $0x8] sm:$0xff]
    %v1368 = vld [vmem:[%s14 + $0x10] sm:$0xff]
    %v1369 = vld [vmem:[%s14 + $0x18] sm:$0xff]
    %v1370 = vld [vmem:[%s14 + $0x20] sm:$0xff]
    %v1371 = vld [vmem:[%s14 + $0x28] sm:$0xff]
    %v1372 = vld [vmem:[%s14 + $0x30] sm:$0xff]
    %v1373 = vld [vmem:[%s14 + $0x38] sm:$0xff]
    %v1374 = vld [vmem:[%s15] sm:$0x1]
    %v1376 = vperm.slane %v1374, 0
    %v1379 = vsel %vm166, %v1365, 0
    %1381 = vmatpush.msra.mxu0 0.0
    %1382 = vmatpush.msra.mxu0 0.0
    %1383 = vmatpush.msra.mxu0 0.0
    %1384 = vmatpush.msra.mxu0 0.0
    %1385 = vmatpush.msra.mxu0 0.0
    %1386 = vmatpush.msra.mxu0 0.0
    %1387 = vmatpush.msra.mxu0 0.0
    %1388 = vmatpush.msra.mxu0 0.0
    %1389 = vmatpush.msra.mxu0 %v1373
    %1390 = vmatpush.msra.mxu0 %v1372
    %1391 = vmatpush.msra.mxu0 %v1371
    %1392 = vmatpush.msra.mxu0 %v1370
    %1393 = vmatpush.msra.mxu0 %v1369
    %1394 = vmatpush.msra.mxu0 %v1368
    %1395 = vmatpush.msra.mxu0 %v1367
    %1396 = vmatpush.msra.mxu0 %v1366
    %1397 = vmatmul.f32.gmra.mxu0 %v1379
    %v1398 = vpop.f32.mrf.mxu0
    %v1399 = vadd.f32 %v1376, %v1398
    %1400 = vdwg.mxu0
    %v1401 = vld [vmem:[%s16] sm:$0xff]
    %v1402 = vld [vmem:[%s16 + $0x8] sm:$0xff]
    %v1403 = vld [vmem:[%s16 + $0x10] sm:$0xff]
    %v1404 = vld [vmem:[%s16 + $0x18] sm:$0xff]
    %v1405 = vld [vmem:[%s17] sm:$0x1]
    %v1407 = vperm.slane %v1405, 0
    %vm1409 = vcmask 261120
    %v1411 = vsel %vm1409, %v1399, 0
    %1413 = vmatpush.msra.mxu0 0.0
    %1414 = vmatpush.msra.mxu0 0.0
    %1415 = vmatpush.msra.mxu0 0.0
    %1416 = vmatpush.msra.mxu0 0.0
    %1417 = vmatpush.msra.mxu0 0.0
    %1418 = vmatpush.msra.mxu0 0.0
    %1419 = vmatpush.msra.mxu0 0.0
    %1420 = vmatpush.msra.mxu0 0.0
    %1421 = vmatpush.msra.mxu0 0.0
    %1422 = vmatpush.msra.mxu0 0.0
    %1423 = vmatpush.msra.mxu0 0.0
    %1424 = vmatpush.msra.mxu0 0.0
    %1425 = vmatpush.msra.mxu0 %v1404
    %1426 = vmatpush.msra.mxu0 %v1403
    %1427 = vmatpush.msra.mxu0 %v1402
    %1428 = vmatpush.msra.mxu0 %v1401
    %1429 = vmatmul.f32.gmra.mxu0 %v1411
    %v1430 = vpop.f32.mrf.mxu0
    %v1431 = vadd.f32 %v1407, %v1430
    %1432 = vdwg.mxu0
    %vm1433 = vcmask 130048
    %v1434 = vsel %vm1433, %v1431, -inf
    %1435 = vmax.xlane.f32.xlu0 %v1434
    %v1436 = vpop.xlane.xlu0 %1435
    %v1437 = vsub.f32 %v1431, %v1436
    %v1438 = vmul.f32 %v1437, 1.442695
    %v1439 = vpow.pop %v1438
    %v1440 = vsel %vm1433, %v1439, 0.0
    %1441 = vadd.xlane.f32.xlu0 %v1440
    %v1442 = vpop.xlane.xlu0 %1441
    %v1443 = vrcp.pop %v1442
    %v1444 = vmul.f32 %v1439, %v1443
    %1445 = vst.msk [vmem:[#allocation11] sm:$0xff] %vm1433, %v1444
    // Predicated region
    $region94: #{tpu_custom_call.1} parent=1 // pred_check
      _
    $region95: #{tpu_custom_call.1} parent=1 // pred_check_branch
      %1447 = sbr.rel (0) target = $region97
    $region96: #{tpu_custom_call.1} parent=1 // pred_region
      %1449 = vsyncadd [#allocation4], 0
      %s1451 = sshll.u32 [#allocation11], 4
      %s1452 = int_to_ptr.vmem [resolvable:$true] %s1451
      %s1453 = sshll.u32 %s18, 4
      %s1454 = int_to_ptr.hbm [resolvable:$true] %s1453
      %1456 = dma.vmem_to_hbm [thread:$0]  %s1452, 128, %s1454, [#allocation4]
    $region97: #{tpu_custom_call.1} parent=1 // pred_fallthru
      _
    // Predicated region
    $region98: #{tpu_custom_call.1} parent=1 // pred_check
      _
    $region99: #{tpu_custom_call.1} parent=1 // pred_check_branch
      %1458 = sbr.rel (0) target = $region101
    $region100: #{tpu_custom_call.1} parent=1 // pred_region
      %1460 = dma.done [#allocation4], 128
    $region101: #{tpu_custom_call.1} parent=1 // pred_fallthru
      _
    %1461 = vsyncpa [#allocation3], 1
    %1462 = vsyncpa [#allocation6], 1
    %1463 = vsyncpa [#allocation9], 1
    %1464 = vsyncpa [#allocation4], 1

</llo_original>
